<compile_context>
chip_gen: v7x
topology: tpu7x:2x2x1
jax: 0.10.0
libtpu: 0.0.40
codegen_flags: <defaults>
</compile_context>

<pallas_src>
import functools

import jax
import jax.numpy as jnp
from jax.experimental import pallas as pl
from jax.experimental.pallas import tpu as pltpu

OUT_LANE = 128  # lane-dense padded width of the kernel output


# ---------------------------------------------------------------------------
# Fused Pallas kernel
# ---------------------------------------------------------------------------
def _autostf_fused_kernel(
    # per-row data tiles
    x_ts_ref, emb_ref, val_ref,
    # weights (full arrays, constant index maps)
    ts_w_ref, ts_b_ref,
    enc_w1_ref, enc_b1_ref, enc_w2_ref, enc_b2_ref,
    fusion_w_ref, fusion_b_ref,
    temporal_w_ref, scale_sel_ref, scale_bias_ref,
    light_w_ref, light_b_ref,
    spat_w_ref, spat_b_ref,
    end1_w_ref, end1_b_ref, end2_w_ref, end2_b_ref,
    # output
    out_ref,
    *, num_mlp_layers, num_scales, H):
    f32 = jnp.float32

    # hidden = [ts_emb | node_emb | day_emb | week_emb]
    # ts_emb weights are zero-padded to full hidden width and the embedding slab
    # is pre-padded with zeros in the first H columns -> no in-kernel concat.
    x = (jnp.dot(x_ts_ref[...], ts_w_ref[...], preferred_element_type=f32)
         + ts_b_ref[...] + emb_ref[...].astype(f32))

    # start_encoder: stack of STID residual MLP blocks, all matmuls in VMEM/vregs.
    for l in range(num_mlp_layers):
        h = jnp.maximum(
            jnp.dot(x, enc_w1_ref[l], preferred_element_type=f32) + enc_b1_ref[l], 0.0)
        x = jnp.dot(h, enc_w2_ref[l], preferred_element_type=f32) + enc_b2_ref[l] + x

    # fusion_layer: Conv2d(hidden_dim -> H, 1x1)
    mlp_residual = (jnp.dot(x, fusion_w_ref[...], preferred_element_type=f32)
                    + fusion_b_ref[...])                                  # (TM, H)

    # Temporal branch + per-scale scale-light conv, folded algebraically:
    #   s[:, i] = sum_t' val[:, i*ss + t'] * w_scale[t']
    #   x_scale_i = s[:, i] * w_temporal + (b_temporal*sum(w_scale) + b_scale)
    # TODO(synk): TemporalSearchLayer NAS cell not in reference -> identity; mask unused.
    s = jnp.dot(val_ref[...].astype(f32), scale_sel_ref[...],
                preferred_element_type=f32)                               # (TM, num_scales)
    tw = temporal_w_ref[...]                                              # (1, H)
    sb = scale_bias_ref[...]                                              # (1, H)

    lw = light_w_ref[...]                                                 # (2H, H)
    lwa, lwb = lw[:H, :], lw[H:, :]
    sw = spat_w_ref[...]                                                  # (num_scales*H, H)

    # start_linear_light on concat([mlp_residual, x_scale]) == split matmul.
    ml_light = (jnp.dot(mlp_residual, lwa, preferred_element_type=f32)
                + light_b_ref[...])

    acc_sp = None
    for i in range(num_scales):
        x_scale = s[:, i:i + 1] * tw + sb                                 # (TM, H), VPU broadcast
        xl = ml_light + jnp.dot(x_scale, lwb, preferred_element_type=f32)
        # TODO(synk): LightLinear / SpatialSearchLayer NAS cells not in reference -> identity.
        contrib = jnp.dot(xl, sw[i * H:(i + 1) * H, :], preferred_element_type=f32)
        acc_sp = contrib if acc_sp is None else acc_sp + contrib
    spatial_residual = acc_sp + spat_b_ref[...]                           # (TM, H)

    # Output head: end_conv1(relu) + end_conv2 on concat([mlp_residual, spatial_residual]).
    e1 = end1_w_ref[...]                                                  # (2H, end)
    h = jnp.maximum(
        jnp.dot(mlp_residual, e1[:H, :], preferred_element_type=f32)
        + jnp.dot(spatial_residual, e1[H:, :], preferred_element_type=f32)
        + end1_b_ref[...], 0.0)
    o = jnp.dot(h, end2_w_ref[...], preferred_element_type=f32) + end2_b_ref[...]
    out_ref[...] = o.astype(out_ref.dtype)                                # (TM, OUT_LANE)


def _tile_rows(m):
    """Pick row tile (sublane axis) and padded row count."""
    if m <= 512:
        m_pad = max(8, ((m + 7) // 8) * 8)
        return m_pad, m_pad          # single grid step
    tm = 512
    m_pad = ((m + tm - 1) // tm) * tm
    return tm, m_pad


def pallas_autostf_fused(x_ts, emb, val, weights, *, num_mlp_layers, num_scales, H):
    """One fused pallas_call over the (B*N, .) row slab."""
    m = x_ts.shape[0]
    tm, m_pad = _tile_rows(m)

    def pad_rows(a):
        return jnp.pad(a, ((0, m_pad - m), (0, 0))) if m_pad != m else a

    x_ts_p, emb_p, val_p = pad_rows(x_ts), pad_rows(emb), pad_rows(val)

    def full(a):
        nd = a.ndim
        return pl.BlockSpec(a.shape, lambda i, _nd=nd: (0,) * _nd)

    in_specs = [
        pl.BlockSpec((tm, x_ts.shape[1]), lambda i: (i, 0)),
        pl.BlockSpec((tm, emb.shape[1]), lambda i: (i, 0)),
        pl.BlockSpec((tm, val.shape[1]), lambda i: (i, 0)),
    ] + [full(w) for w in weights]

    out = pl.pallas_call(
        functools.partial(_autostf_fused_kernel,
                          num_mlp_layers=num_mlp_layers,
                          num_scales=num_scales, H=H),
        out_shape=jax.ShapeDtypeStruct((m_pad, OUT_LANE), x_ts.dtype),
        grid_spec=pltpu.PrefetchScalarGridSpec(
            num_scalar_prefetch=0,
            grid=(m_pad // tm,),
            in_specs=in_specs,
            out_specs=pl.BlockSpec((tm, OUT_LANE), lambda i: (i, 0)),
        ),
        compiler_params=pltpu.CompilerParams(dimension_semantics=("parallel",)),
    )(x_ts_p, emb_p, val_p, *weights)
    return out[:m]


# ---------------------------------------------------------------------------
# Config & deterministic parameter construction
# ---------------------------------------------------------------------------
class Cfg:
    pass


def make_config():
    cfg = Cfg()
    cfg.in_length = 8
    cfg.out_length = 4
    cfg.num_sensors = 16
    cfg.in_channels = 3          # value, time-of-day, day-of-week
    cfg.out_channels = 1
    cfg.hidden_channels = 32
    cfg.end_channels = 64
    cfg.scale_list = [1, 2]
    cfg.num_mlp_layers = 2
    cfg.layer_names = ["TemporalSearch", "SpatialSearch"]
    cfg.IsUseLinear = True
    cfg.mlp_node_dim = 32
    cfg.temp_dim_tid = 32
    cfg.temp_dim_diw = 32
    cfg.time_of_day_size = 288
    cfg.day_of_week_size = 7
    return cfg


def xavier_uniform(key, shape):
    fan_in, fan_out = shape[-2], shape[-1]
    limit = (6.0 / (fan_in + fan_out)) ** 0.5
    return jax.random.uniform(key, shape, jnp.float32, -limit, limit)


def make_params(cfg, key):
    ks = jax.random.split(key, 32)
    H = cfg.hidden_channels
    hidden_dim = H + cfg.mlp_node_dim + cfg.temp_dim_tid + cfg.temp_dim_diw
    scale_step = cfg.in_length // len(cfg.scale_list)
    p = {}
    p["node_emb"] = xavier_uniform(ks[0], (cfg.num_sensors, cfg.mlp_node_dim))
    p["time_in_day_emb"] = xavier_uniform(ks[1], (cfg.time_of_day_size, cfg.temp_dim_tid))
    p["day_in_week_emb"] = xavier_uniform(ks[2], (cfg.day_of_week_size, cfg.temp_dim_diw))
    # 1x1 conv weights stored as (Cin, Cout) matrices (== torch weight[:, :, 0, 0].T)
    p["ts_emb_w"] = xavier_uniform(ks[3], (cfg.in_channels * cfg.in_length, H))
    p["ts_emb_b"] = jnp.zeros((H,), jnp.float32)
    enc = []
    for i in range(cfg.num_mlp_layers):
        enc.append((
            xavier_uniform(ks[4 + 2 * i], (hidden_dim, hidden_dim)),
            jnp.zeros((hidden_dim,), jnp.float32),
            xavier_uniform(ks[5 + 2 * i], (hidden_dim, hidden_dim)),
            jnp.zeros((hidden_dim,), jnp.float32),
        ))
    p["start_encoder"] = enc
    p["fusion_w"] = xavier_uniform(ks[10], (hidden_dim, H))
    p["fusion_b"] = jnp.zeros((H,), jnp.float32)
    p["start_temporal_w"] = xavier_uniform(ks[11], (1, H))
    p["start_temporal_b"] = jnp.zeros((H,), jnp.float32)
    p["start_scale_light_w"] = xavier_uniform(ks[12], (scale_step, 1))
    p["start_scale_light_b"] = jnp.zeros((1,), jnp.float32)
    p["start_linear_light_w"] = xavier_uniform(ks[13], (2 * H, H))
    p["start_linear_light_b"] = jnp.zeros((H,), jnp.float32)
    p["node_vec1"] = jax.random.normal(ks[14], (cfg.num_sensors, 10), jnp.float32)
    p["node_vec2"] = jax.random.normal(ks[15], (10, cfg.num_sensors), jnp.float32)
    p["spatial_fusion_w"] = xavier_uniform(ks[16], (H * len(cfg.scale_list), H))
    p["spatial_fusion_b"] = jnp.zeros((H,), jnp.float32)
    p["end1_w"] = xavier_uniform(ks[17], (2 * H, cfg.end_channels))
    p["end1_b"] = jnp.zeros((cfg.end_channels,), jnp.float32)
    p["end2_w"] = xavier_uniform(ks[18], (cfg.end_channels, cfg.out_length * cfg.out_channels))
    p["end2_b"] = jnp.zeros((cfg.out_length * cfg.out_channels,), jnp.float32)
    return p


# ---------------------------------------------------------------------------
# AutoSTF forward (JAX glue around the single fused Pallas kernel)
# ---------------------------------------------------------------------------
def autostf_forward(params, inputs, cfg, mask):
    # inputs: (B, num_features, num_nodes, num_timestep)  -- PyTorch NCHW-like
    # TODO(synk): `mask` feeds the NAS search cells (not in reference) -> unused here.
    B, F_, N, T = inputs.shape
    H = cfg.hidden_channels
    ns = len(cfg.scale_list)
    ss = cfg.in_length // ns
    hidden_dim = H + cfg.mlp_node_dim + cfg.temp_dim_tid + cfg.temp_dim_diw
    out_w = cfg.out_length * cfg.out_channels

    history = jnp.transpose(inputs, (0, 3, 2, 1))          # (B, T, N, F)
    input_data = history[..., : cfg.in_channels]            # (B, T, N, Cin)

    # temporal embeddings (gathers are glue, stay in JAX)
    tid_last = history[:, -1, :, 1]                          # (B, N)
    day_emb = params["time_in_day_emb"][(tid_last * cfg.time_of_day_size).astype(jnp.int32)]
    diw_last = history[:, -1, :, 2]
    week_emb = params["day_in_week_emb"][diw_last.astype(jnp.int32)]
    node_emb = jnp.broadcast_to(params["node_emb"][None], (B, N, cfg.mlp_node_dim))

    # Flattened row slabs (M = B*N on the sublane axis).
    x_ts = jnp.transpose(input_data, (0, 2, 1, 3)).reshape(B * N, T * cfg.in_channels)
    emb = jnp.concatenate([node_emb, day_emb, week_emb], axis=-1).reshape(B * N, hidden_dim - H)
    emb128 = jnp.pad(emb, ((0, 0), (H, 0)))                  # zeros where ts_emb will land
    val = inputs[:, 0, :, :].reshape(B * N, T)               # raw traffic values

    # ---- weight preparation (tiny, param-only ops) -------------------------
    ts_w_p = jnp.pad(params["ts_emb_w"], ((0, 0), (0, hidden_dim - H)))
    ts_b_p = jnp.pad(params["ts_emb_b"], (0, hidden_dim - H)).reshape(1, hidden_dim)

    enc_w1 = jnp.stack([w1 for (w1, _, _, _) in params["start_encoder"]])
    enc_b1 = jnp.stack([b1.reshape(1, -1) for (_, b1, _, _) in params["start_encoder"]])
    enc_w2 = jnp.stack([w2 for (_, _, w2, _) in params["start_encoder"]])
    enc_b2 = jnp.stack([b2.reshape(1, -1) for (_, _, _, b2) in params["start_encoder"]])

    fusion_w = params["fusion_w"]
    fusion_b = params["fusion_b"].reshape(1, H)

    # start_temporal (Conv 1->H) folded with start_scale_light (Conv ss->1):
    sw = params["start_scale_light_w"][:, 0]                 # (ss,)
    scale_sel = jnp.zeros((T, ns), jnp.float32)
    for i in range(ns):
        scale_sel = scale_sel.at[i * ss:(i + 1) * ss, i].set(sw)
    temporal_w = params["start_temporal_w"].reshape(1, H)
    scale_bias = (params["start_temporal_b"] * jnp.sum(sw)
                  + params["start_scale_light_b"][0]).reshape(1, H)

    light_w = params["start_linear_light_w"]
    light_b = params["start_linear_light_b"].reshape(1, H)
    spat_w = params["spatial_fusion_w"]
    spat_b = params["spatial_fusion_b"].reshape(1, H)
    end1_w = params["end1_w"]
    end1_b = params["end1_b"].reshape(1, cfg.end_channels)
    # lane-dense output: pad end2 to 128 output columns (zeros), slice in wrapper
    end2_w = jnp.pad(params["end2_w"], ((0, 0), (0, OUT_LANE - out_w)))
    end2_b = jnp.pad(params["end2_b"], (0, OUT_LANE - out_w)).reshape(1, OUT_LANE)

    weights = [ts_w_p, ts_b_p, enc_w1, enc_b1, enc_w2, enc_b2,
               fusion_w, fusion_b, temporal_w, scale_sel, scale_bias,
               light_w, light_b, spat_w, spat_b,
               end1_w, end1_b, end2_w, end2_b]

    out = pallas_autostf_fused(x_ts, emb128, val, weights,
                               num_mlp_layers=cfg.num_mlp_layers,
                               num_scales=ns, H=H)
    out = out[:, :out_w].reshape(B, N, out_w)
    return out[:, None, :, :]                                # (B, 1, N, out_len*out_ch)


# ---------------------------------------------------------------------------
if __name__ == "__main__":
    cfg = make_config()
    key = jax.random.PRNGKey(0)
    k_par, k_val, k_tid, k_diw, k_adj0, k_adj1 = jax.random.split(key, 6)

    params = make_params(cfg, k_par)

    B, F_, N, T = 2, cfg.in_channels, cfg.num_sensors, cfg.in_length
    # feature 0: traffic value; feature 1: time-of-day in [0,1); feature 2: day-of-week idx
    val = jax.random.normal(k_val, (B, 1, N, T), jnp.float32)
    tod = jax.random.uniform(k_tid, (B, 1, N, T), jnp.float32, 0.0, 0.999)
    dow = jax.random.randint(k_diw, (B, 1, N, T), 0, cfg.day_of_week_size).astype(jnp.float32)
    inputs = jnp.concatenate([val, tod, dow], axis=1)                  # (B, 3, N, T)

    # mask_support_adj -> mask == ((adj0 + adj1) == 0); unused by identity search cells.
    adj0 = (jax.random.uniform(k_adj0, (N, N)) > 0.7).astype(jnp.float32)
    adj1 = (jax.random.uniform(k_adj1, (N, N)) > 0.7).astype(jnp.float32)
    mask = (adj0 + adj1) == 0

    fwd = jax.jit(functools.partial(autostf_forward, cfg=cfg))
    out = fwd(params, inputs, mask=mask)
    out = jax.block_until_ready(out)

    expected = (B, 1, N, cfg.out_length * cfg.out_channels)
    assert out.shape == expected, f"got {out.shape}, expected {expected}"
    assert bool(jnp.all(jnp.isfinite(out)))
    print("KERNEL_OK")
</pallas_src>

<mosaic_0001>
module attributes {stable_mosaic.version = 11 : i64} {
  func.func @_autostf_fused_kernel(%arg0: i32, %arg1: memref<32x24xf32, #tpu.memory_space<vmem>>, %arg2: memref<32x128xf32, #tpu.memory_space<vmem>>, %arg3: memref<32x8xf32, #tpu.memory_space<vmem>>, %arg4: memref<24x128xf32, #tpu.memory_space<vmem>>, %arg5: memref<1x128xf32, #tpu.memory_space<vmem>>, %arg6: memref<2x128x128xf32, #tpu.memory_space<vmem>>, %arg7: memref<2x1x128xf32, #tpu.memory_space<vmem>>, %arg8: memref<2x128x128xf32, #tpu.memory_space<vmem>>, %arg9: memref<2x1x128xf32, #tpu.memory_space<vmem>>, %arg10: memref<128x32xf32, #tpu.memory_space<vmem>>, %arg11: memref<1x32xf32, #tpu.memory_space<vmem>>, %arg12: memref<1x32xf32, #tpu.memory_space<vmem>>, %arg13: memref<8x2xf32, #tpu.memory_space<vmem>>, %arg14: memref<1x32xf32, #tpu.memory_space<vmem>>, %arg15: memref<64x32xf32, #tpu.memory_space<vmem>>, %arg16: memref<1x32xf32, #tpu.memory_space<vmem>>, %arg17: memref<64x32xf32, #tpu.memory_space<vmem>>, %arg18: memref<1x32xf32, #tpu.memory_space<vmem>>, %arg19: memref<64x64xf32, #tpu.memory_space<vmem>>, %arg20: memref<1x64xf32, #tpu.memory_space<vmem>>, %arg21: memref<64x128xf32, #tpu.memory_space<vmem>>, %arg22: memref<1x128xf32, #tpu.memory_space<vmem>>, %arg23: memref<32x128xf32, #tpu.memory_space<vmem>>) attributes {dimension_semantics = [#tpu.dimension_semantics<parallel>], iteration_bounds = array<i64: 1>, scalar_prefetch = 0 : i64, scratch_operands = 0 : i64, tpu.core_type = #tpu.core_type<tc>, window_params = [{transform_indices = @transform_0, window_bounds = array<i64: 32, 24>}, {transform_indices = @transform_1, window_bounds = array<i64: 32, 128>}, {transform_indices = @transform_2, window_bounds = array<i64: 32, 8>}, {pipeline_mode = #tpu.pipeline_mode<synchronous>, transform_indices = @transform_3, window_bounds = array<i64: 24, 128>}, {pipeline_mode = #tpu.pipeline_mode<synchronous>, transform_indices = @transform_4, window_bounds = array<i64: 1, 128>}, {pipeline_mode = #tpu.pipeline_mode<synchronous>, transform_indices = @transform_5, window_bounds = array<i64: 2, 128, 128>}, {pipeline_mode = #tpu.pipeline_mode<synchronous>, transform_indices = @transform_6, window_bounds = array<i64: 2, 1, 128>}, {pipeline_mode = #tpu.pipeline_mode<synchronous>, transform_indices = @transform_7, window_bounds = array<i64: 2, 128, 128>}, {pipeline_mode = #tpu.pipeline_mode<synchronous>, transform_indices = @transform_8, window_bounds = array<i64: 2, 1, 128>}, {pipeline_mode = #tpu.pipeline_mode<synchronous>, transform_indices = @transform_9, window_bounds = array<i64: 128, 32>}, {pipeline_mode = #tpu.pipeline_mode<synchronous>, transform_indices = @transform_10, window_bounds = array<i64: 1, 32>}, {pipeline_mode = #tpu.pipeline_mode<synchronous>, transform_indices = @transform_11, window_bounds = array<i64: 1, 32>}, {pipeline_mode = #tpu.pipeline_mode<synchronous>, transform_indices = @transform_12, window_bounds = array<i64: 8, 2>}, {pipeline_mode = #tpu.pipeline_mode<synchronous>, transform_indices = @transform_13, window_bounds = array<i64: 1, 32>}, {pipeline_mode = #tpu.pipeline_mode<synchronous>, transform_indices = @transform_14, window_bounds = array<i64: 64, 32>}, {pipeline_mode = #tpu.pipeline_mode<synchronous>, transform_indices = @transform_15, window_bounds = array<i64: 1, 32>}, {pipeline_mode = #tpu.pipeline_mode<synchronous>, transform_indices = @transform_16, window_bounds = array<i64: 64, 32>}, {pipeline_mode = #tpu.pipeline_mode<synchronous>, transform_indices = @transform_17, window_bounds = array<i64: 1, 32>}, {pipeline_mode = #tpu.pipeline_mode<synchronous>, transform_indices = @transform_18, window_bounds = array<i64: 64, 64>}, {pipeline_mode = #tpu.pipeline_mode<synchronous>, transform_indices = @transform_19, window_bounds = array<i64: 1, 64>}, {pipeline_mode = #tpu.pipeline_mode<synchronous>, transform_indices = @transform_20, window_bounds = array<i64: 64, 128>}, {pipeline_mode = #tpu.pipeline_mode<synchronous>, transform_indices = @transform_21, window_bounds = array<i64: 1, 128>}, {transform_indices = @transform_22, window_bounds = array<i64: 32, 128>}]} {
    %c0 = arith.constant 0 : index
    %c0_0 = arith.constant 0 : index
    %0 = vector.load %arg1[%c0, %c0_0] : memref<32x24xf32, #tpu.memory_space<vmem>>, vector<32x24xf32>
    %c0_1 = arith.constant 0 : index
    %c0_2 = arith.constant 0 : index
    %1 = vector.load %arg4[%c0_1, %c0_2] : memref<24x128xf32, #tpu.memory_space<vmem>>, vector<24x128xf32>
    %cst = arith.constant dense<0.000000e+00> : vector<32x128xf32>
    %2 = tpu.matmul %0, %1, %cst {dimension_numbers = #tpu.dot_dimension_numbers<[1], [0], [0], [1], [0, 0, 1, 1], [], []>} : vector<32x24xf32>, vector<24x128xf32>, vector<32x128xf32> -> vector<32x128xf32>
    %c0_3 = arith.constant 0 : index
    %c0_4 = arith.constant 0 : index
    %3 = vector.load %arg5[%c0_3, %c0_4] : memref<1x128xf32, #tpu.memory_space<vmem>>, vector<1x128xf32>
    %4 = vector.broadcast %3 : vector<1x128xf32> to vector<32x128xf32>
    %5 = arith.addf %2, %4 : vector<32x128xf32>
    %c0_5 = arith.constant 0 : index
    %c0_6 = arith.constant 0 : index
    %6 = vector.load %arg2[%c0_5, %c0_6] : memref<32x128xf32, #tpu.memory_space<vmem>>, vector<32x128xf32>
    %7 = arith.addf %5, %6 : vector<32x128xf32>
    %c0_7 = arith.constant 0 : index
    %c0_8 = arith.constant 0 : index
    %c0_9 = arith.constant 0 : index
    %8 = vector.load %arg6[%c0_7, %c0_8, %c0_9] : memref<2x128x128xf32, #tpu.memory_space<vmem>>, vector<1x128x128xf32>
    %9 = vector.shape_cast %8 : vector<1x128x128xf32> to vector<128x128xf32>
    %cst_10 = arith.constant dense<0.000000e+00> : vector<32x128xf32>
    %10 = tpu.matmul %7, %9, %cst_10 {dimension_numbers = #tpu.dot_dimension_numbers<[1], [0], [0], [1], [0, 0, 1, 1], [], []>} : vector<32x128xf32>, vector<128x128xf32>, vector<32x128xf32> -> vector<32x128xf32>
    %c0_11 = arith.constant 0 : index
    %c0_12 = arith.constant 0 : index
    %c0_13 = arith.constant 0 : index
    %11 = vector.load %arg7[%c0_11, %c0_12, %c0_13] : memref<2x1x128xf32, #tpu.memory_space<vmem>>, vector<1x1x128xf32>
    %12 = vector.shape_cast %11 : vector<1x1x128xf32> to vector<1x128xf32>
    %13 = vector.broadcast %12 : vector<1x128xf32> to vector<32x128xf32>
    %14 = arith.addf %10, %13 : vector<32x128xf32>
    %cst_14 = arith.constant 0.000000e+00 : f32
    %15 = vector.broadcast %cst_14 : f32 to vector<32x128xf32>
    %16 = arith.maximumf %14, %15 : vector<32x128xf32>
    %c0_15 = arith.constant 0 : index
    %c0_16 = arith.constant 0 : index
    %c0_17 = arith.constant 0 : index
    %17 = vector.load %arg8[%c0_15, %c0_16, %c0_17] : memref<2x128x128xf32, #tpu.memory_space<vmem>>, vector<1x128x128xf32>
    %18 = vector.shape_cast %17 : vector<1x128x128xf32> to vector<128x128xf32>
    %cst_18 = arith.constant dense<0.000000e+00> : vector<32x128xf32>
    %19 = tpu.matmul %16, %18, %cst_18 {dimension_numbers = #tpu.dot_dimension_numbers<[1], [0], [0], [1], [0, 0, 1, 1], [], []>} : vector<32x128xf32>, vector<128x128xf32>, vector<32x128xf32> -> vector<32x128xf32>
    %c0_19 = arith.constant 0 : index
    %c0_20 = arith.constant 0 : index
    %c0_21 = arith.constant 0 : index
    %20 = vector.load %arg9[%c0_19, %c0_20, %c0_21] : memref<2x1x128xf32, #tpu.memory_space<vmem>>, vector<1x1x128xf32>
    %21 = vector.shape_cast %20 : vector<1x1x128xf32> to vector<1x128xf32>
    %22 = vector.broadcast %21 : vector<1x128xf32> to vector<32x128xf32>
    %23 = arith.addf %19, %22 : vector<32x128xf32>
    %24 = arith.addf %23, %7 : vector<32x128xf32>
    %c1 = arith.constant 1 : index
    %c0_22 = arith.constant 0 : index
    %c0_23 = arith.constant 0 : index
    %25 = vector.load %arg6[%c1, %c0_22, %c0_23] : memref<2x128x128xf32, #tpu.memory_space<vmem>>, vector<1x128x128xf32>
    %26 = vector.shape_cast %25 : vector<1x128x128xf32> to vector<128x128xf32>
    %cst_24 = arith.constant dense<0.000000e+00> : vector<32x128xf32>
    %27 = tpu.matmul %24, %26, %cst_24 {dimension_numbers = #tpu.dot_dimension_numbers<[1], [0], [0], [1], [0, 0, 1, 1], [], []>} : vector<32x128xf32>, vector<128x128xf32>, vector<32x128xf32> -> vector<32x128xf32>
    %c1_25 = arith.constant 1 : index
    %c0_26 = arith.constant 0 : index
    %c0_27 = arith.constant 0 : index
    %28 = vector.load %arg7[%c1_25, %c0_26, %c0_27] : memref<2x1x128xf32, #tpu.memory_space<vmem>>, vector<1x1x128xf32>
    %29 = vector.shape_cast %28 : vector<1x1x128xf32> to vector<1x128xf32>
    %30 = vector.broadcast %29 : vector<1x128xf32> to vector<32x128xf32>
    %31 = arith.addf %27, %30 : vector<32x128xf32>
    %cst_28 = arith.constant 0.000000e+00 : f32
    %32 = vector.broadcast %cst_28 : f32 to vector<32x128xf32>
    %33 = arith.maximumf %31, %32 : vector<32x128xf32>
    %c1_29 = arith.constant 1 : index
    %c0_30 = arith.constant 0 : index
    %c0_31 = arith.constant 0 : index
    %34 = vector.load %arg8[%c1_29, %c0_30, %c0_31] : memref<2x128x128xf32, #tpu.memory_space<vmem>>, vector<1x128x128xf32>
    %35 = vector.shape_cast %34 : vector<1x128x128xf32> to vector<128x128xf32>
    %cst_32 = arith.constant dense<0.000000e+00> : vector<32x128xf32>
    %36 = tpu.matmul %33, %35, %cst_32 {dimension_numbers = #tpu.dot_dimension_numbers<[1], [0], [0], [1], [0, 0, 1, 1], [], []>} : vector<32x128xf32>, vector<128x128xf32>, vector<32x128xf32> -> vector<32x128xf32>
    %c1_33 = arith.constant 1 : index
    %c0_34 = arith.constant 0 : index
    %c0_35 = arith.constant 0 : index
    %37 = vector.load %arg9[%c1_33, %c0_34, %c0_35] : memref<2x1x128xf32, #tpu.memory_space<vmem>>, vector<1x1x128xf32>
    %38 = vector.shape_cast %37 : vector<1x1x128xf32> to vector<1x128xf32>
    %39 = vector.broadcast %38 : vector<1x128xf32> to vector<32x128xf32>
    %40 = arith.addf %36, %39 : vector<32x128xf32>
    %41 = arith.addf %40, %24 : vector<32x128xf32>
    %c0_36 = arith.constant 0 : index
    %c0_37 = arith.constant 0 : index
    %42 = vector.load %arg10[%c0_36, %c0_37] : memref<128x32xf32, #tpu.memory_space<vmem>>, vector<128x32xf32>
    %cst_38 = arith.constant dense<0.000000e+00> : vector<32x32xf32>
    %43 = tpu.matmul %41, %42, %cst_38 {dimension_numbers = #tpu.dot_dimension_numbers<[1], [0], [0], [1], [0, 0, 1, 1], [], []>} : vector<32x128xf32>, vector<128x32xf32>, vector<32x32xf32> -> vector<32x32xf32>
    %c0_39 = arith.constant 0 : index
    %c0_40 = arith.constant 0 : index
    %44 = vector.load %arg11[%c0_39, %c0_40] : memref<1x32xf32, #tpu.memory_space<vmem>>, vector<1x32xf32>
    %45 = vector.broadcast %44 : vector<1x32xf32> to vector<32x32xf32>
    %46 = arith.addf %43, %45 : vector<32x32xf32>
    %c0_41 = arith.constant 0 : index
    %c0_42 = arith.constant 0 : index
    %47 = vector.load %arg3[%c0_41, %c0_42] : memref<32x8xf32, #tpu.memory_space<vmem>>, vector<32x8xf32>
    %c0_43 = arith.constant 0 : index
    %c0_44 = arith.constant 0 : index
    %48 = vector.load %arg13[%c0_43, %c0_44] : memref<8x2xf32, #tpu.memory_space<vmem>>, vector<8x2xf32>
    %cst_45 = arith.constant dense<0.000000e+00> : vector<32x2xf32>
    %49 = tpu.matmul %47, %48, %cst_45 {dimension_numbers = #tpu.dot_dimension_numbers<[1], [0], [0], [1], [0, 0, 1, 1], [], []>} : vector<32x8xf32>, vector<8x2xf32>, vector<32x2xf32> -> vector<32x2xf32>
    %c0_46 = arith.constant 0 : index
    %c0_47 = arith.constant 0 : index
    %50 = vector.load %arg12[%c0_46, %c0_47] : memref<1x32xf32, #tpu.memory_space<vmem>>, vector<1x32xf32>
    %c0_48 = arith.constant 0 : index
    %c0_49 = arith.constant 0 : index
    %51 = vector.load %arg14[%c0_48, %c0_49] : memref<1x32xf32, #tpu.memory_space<vmem>>, vector<1x32xf32>
    %c0_50 = arith.constant 0 : index
    %c0_51 = arith.constant 0 : index
    %52 = vector.load %arg15[%c0_50, %c0_51] : memref<64x32xf32, #tpu.memory_space<vmem>>, vector<64x32xf32>
    %53 = vector.extract_strided_slice %52 {offsets = [0, 0], sizes = [32, 32], strides = [1, 1]} : vector<64x32xf32> to vector<32x32xf32>
    %54 = vector.extract_strided_slice %52 {offsets = [32, 0], sizes = [32, 32], strides = [1, 1]} : vector<64x32xf32> to vector<32x32xf32>
    %c0_52 = arith.constant 0 : index
    %c0_53 = arith.constant 0 : index
    %55 = vector.load %arg17[%c0_52, %c0_53] : memref<64x32xf32, #tpu.memory_space<vmem>>, vector<64x32xf32>
    %cst_54 = arith.constant dense<0.000000e+00> : vector<32x32xf32>
    %56 = tpu.matmul %46, %53, %cst_54 {dimension_numbers = #tpu.dot_dimension_numbers<[1], [0], [0], [1], [0, 0, 1, 1], [], []>} : vector<32x32xf32>, vector<32x32xf32>, vector<32x32xf32> -> vector<32x32xf32>
    %c0_55 = arith.constant 0 : index
    %c0_56 = arith.constant 0 : index
    %57 = vector.load %arg16[%c0_55, %c0_56] : memref<1x32xf32, #tpu.memory_space<vmem>>, vector<1x32xf32>
    %58 = vector.broadcast %57 : vector<1x32xf32> to vector<32x32xf32>
    %59 = arith.addf %56, %58 : vector<32x32xf32>
    %60 = vector.extract_strided_slice %49 {offsets = [0, 0], sizes = [32, 1], strides = [1, 1]} : vector<32x2xf32> to vector<32x1xf32>
    %61 = vector.broadcast %60 : vector<32x1xf32> to vector<32x32xf32>
    %62 = vector.broadcast %50 : vector<1x32xf32> to vector<32x32xf32>
    %63 = arith.mulf %61, %62 : vector<32x32xf32>
    %64 = vector.broadcast %51 : vector<1x32xf32> to vector<32x32xf32>
    %65 = arith.addf %63, %64 : vector<32x32xf32>
    %cst_57 = arith.constant dense<0.000000e+00> : vector<32x32xf32>
    %66 = tpu.matmul %65, %54, %cst_57 {dimension_numbers = #tpu.dot_dimension_numbers<[1], [0], [0], [1], [0, 0, 1, 1], [], []>} : vector<32x32xf32>, vector<32x32xf32>, vector<32x32xf32> -> vector<32x32xf32>
    %67 = arith.addf %59, %66 : vector<32x32xf32>
    %68 = vector.extract_strided_slice %55 {offsets = [0, 0], sizes = [32, 32], strides = [1, 1]} : vector<64x32xf32> to vector<32x32xf32>
    %cst_58 = arith.constant dense<0.000000e+00> : vector<32x32xf32>
    %69 = tpu.matmul %67, %68, %cst_58 {dimension_numbers = #tpu.dot_dimension_numbers<[1], [0], [0], [1], [0, 0, 1, 1], [], []>} : vector<32x32xf32>, vector<32x32xf32>, vector<32x32xf32> -> vector<32x32xf32>
    %70 = vector.extract_strided_slice %49 {offsets = [0, 1], sizes = [32, 1], strides = [1, 1]} : vector<32x2xf32> to vector<32x1xf32>
    %71 = vector.broadcast %70 : vector<32x1xf32> to vector<32x32xf32>
    %72 = vector.broadcast %50 : vector<1x32xf32> to vector<32x32xf32>
    %73 = arith.mulf %71, %72 : vector<32x32xf32>
    %74 = vector.broadcast %51 : vector<1x32xf32> to vector<32x32xf32>
    %75 = arith.addf %73, %74 : vector<32x32xf32>
    %cst_59 = arith.constant dense<0.000000e+00> : vector<32x32xf32>
    %76 = tpu.matmul %75, %54, %cst_59 {dimension_numbers = #tpu.dot_dimension_numbers<[1], [0], [0], [1], [0, 0, 1, 1], [], []>} : vector<32x32xf32>, vector<32x32xf32>, vector<32x32xf32> -> vector<32x32xf32>
    %77 = arith.addf %59, %76 : vector<32x32xf32>
    %78 = vector.extract_strided_slice %55 {offsets = [32, 0], sizes = [32, 32], strides = [1, 1]} : vector<64x32xf32> to vector<32x32xf32>
    %cst_60 = arith.constant dense<0.000000e+00> : vector<32x32xf32>
    %79 = tpu.matmul %77, %78, %cst_60 {dimension_numbers = #tpu.dot_dimension_numbers<[1], [0], [0], [1], [0, 0, 1, 1], [], []>} : vector<32x32xf32>, vector<32x32xf32>, vector<32x32xf32> -> vector<32x32xf32>
    %80 = arith.addf %69, %79 : vector<32x32xf32>
    %c0_61 = arith.constant 0 : index
    %c0_62 = arith.constant 0 : index
    %81 = vector.load %arg18[%c0_61, %c0_62] : memref<1x32xf32, #tpu.memory_space<vmem>>, vector<1x32xf32>
    %82 = vector.broadcast %81 : vector<1x32xf32> to vector<32x32xf32>
    %83 = arith.addf %80, %82 : vector<32x32xf32>
    %c0_63 = arith.constant 0 : index
    %c0_64 = arith.constant 0 : index
    %84 = vector.load %arg19[%c0_63, %c0_64] : memref<64x64xf32, #tpu.memory_space<vmem>>, vector<64x64xf32>
    %85 = vector.extract_strided_slice %84 {offsets = [0, 0], sizes = [32, 64], strides = [1, 1]} : vector<64x64xf32> to vector<32x64xf32>
    %cst_65 = arith.constant dense<0.000000e+00> : vector<32x64xf32>
    %86 = tpu.matmul %46, %85, %cst_65 {dimension_numbers = #tpu.dot_dimension_numbers<[1], [0], [0], [1], [0, 0, 1, 1], [], []>} : vector<32x32xf32>, vector<32x64xf32>, vector<32x64xf32> -> vector<32x64xf32>
    %87 = vector.extract_strided_slice %84 {offsets = [32, 0], sizes = [32, 64], strides = [1, 1]} : vector<64x64xf32> to vector<32x64xf32>
    %cst_66 = arith.constant dense<0.000000e+00> : vector<32x64xf32>
    %88 = tpu.matmul %83, %87, %cst_66 {dimension_numbers = #tpu.dot_dimension_numbers<[1], [0], [0], [1], [0, 0, 1, 1], [], []>} : vector<32x32xf32>, vector<32x64xf32>, vector<32x64xf32> -> vector<32x64xf32>
    %89 = arith.addf %86, %88 : vector<32x64xf32>
    %c0_67 = arith.constant 0 : index
    %c0_68 = arith.constant 0 : index
    %90 = vector.load %arg20[%c0_67, %c0_68] : memref<1x64xf32, #tpu.memory_space<vmem>>, vector<1x64xf32>
    %91 = vector.broadcast %90 : vector<1x64xf32> to vector<32x64xf32>
    %92 = arith.addf %89, %91 : vector<32x64xf32>
    %cst_69 = arith.constant 0.000000e+00 : f32
    %93 = vector.broadcast %cst_69 : f32 to vector<32x64xf32>
    %94 = arith.maximumf %92, %93 : vector<32x64xf32>
    %c0_70 = arith.constant 0 : index
    %c0_71 = arith.constant 0 : index
    %95 = vector.load %arg21[%c0_70, %c0_71] : memref<64x128xf32, #tpu.memory_space<vmem>>, vector<64x128xf32>
    %cst_72 = arith.constant dense<0.000000e+00> : vector<32x128xf32>
    %96 = tpu.matmul %94, %95, %cst_72 {dimension_numbers = #tpu.dot_dimension_numbers<[1], [0], [0], [1], [0, 0, 1, 1], [], []>} : vector<32x64xf32>, vector<64x128xf32>, vector<32x128xf32> -> vector<32x128xf32>
    %c0_73 = arith.constant 0 : index
    %c0_74 = arith.constant 0 : index
    %97 = vector.load %arg22[%c0_73, %c0_74] : memref<1x128xf32, #tpu.memory_space<vmem>>, vector<1x128xf32>
    %98 = vector.broadcast %97 : vector<1x128xf32> to vector<32x128xf32>
    %99 = arith.addf %96, %98 : vector<32x128xf32>
    %c0_75 = arith.constant 0 : index
    %c0_76 = arith.constant 0 : index
    %100 = vector.load %arg23[%c0_75, %c0_76] : memref<32x128xf32, #tpu.memory_space<vmem>>, vector<32x128xf32>
    tpu.vector_store %arg23[%c0_75, %c0_76], %99 {strides = array<i32>} : memref<32x128xf32, #tpu.memory_space<vmem>>, vector<32x128xf32>,
    return
  }
  func.func @transform_0(%arg0: i32) -> (i32, i32) {
    %c0_i32 = arith.constant 0 : i32
    %c0_i32_0 = arith.constant 0 : i32
    return %arg0, %c0_i32 : i32, i32
  }
  func.func @transform_1(%arg0: i32) -> (i32, i32) {
    %c0_i32 = arith.constant 0 : i32
    %c0_i32_0 = arith.constant 0 : i32
    return %arg0, %c0_i32 : i32, i32
  }
  func.func @transform_2(%arg0: i32) -> (i32, i32) {
    %c0_i32 = arith.constant 0 : i32
    %c0_i32_0 = arith.constant 0 : i32
    return %arg0, %c0_i32 : i32, i32
  }
  func.func @transform_3(%arg0: i32) -> (i32, i32) {
    %c0_i32 = arith.constant 0 : i32
    %c0_i32_0 = arith.constant 0 : i32
    %c0_i32_1 = arith.constant 0 : i32
    return %c0_i32, %c0_i32_0 : i32, i32
  }
  func.func @transform_4(%arg0: i32) -> (i32, i32) {
    %c0_i32 = arith.constant 0 : i32
    %c0_i32_0 = arith.constant 0 : i32
    %c0_i32_1 = arith.constant 0 : i32
    return %c0_i32, %c0_i32_0 : i32, i32
  }
  func.func @transform_5(%arg0: i32) -> (i32, i32, i32) {
    %c0_i32 = arith.constant 0 : i32
    %c0_i32_0 = arith.constant 0 : i32
    %c0_i32_1 = arith.constant 0 : i32
    %c0_i32_2 = arith.constant 0 : i32
    return %c0_i32, %c0_i32_0, %c0_i32_1 : i32, i32, i32
  }
  func.func @transform_6(%arg0: i32) -> (i32, i32, i32) {
    %c0_i32 = arith.constant 0 : i32
    %c0_i32_0 = arith.constant 0 : i32
    %c0_i32_1 = arith.constant 0 : i32
    %c0_i32_2 = arith.constant 0 : i32
    return %c0_i32, %c0_i32_0, %c0_i32_1 : i32, i32, i32
  }
  func.func @transform_7(%arg0: i32) -> (i32, i32, i32) {
    %c0_i32 = arith.constant 0 : i32
    %c0_i32_0 = arith.constant 0 : i32
    %c0_i32_1 = arith.constant 0 : i32
    %c0_i32_2 = arith.constant 0 : i32
    return %c0_i32, %c0_i32_0, %c0_i32_1 : i32, i32, i32
  }
  func.func @transform_8(%arg0: i32) -> (i32, i32, i32) {
    %c0_i32 = arith.constant 0 : i32
    %c0_i32_0 = arith.constant 0 : i32
    %c0_i32_1 = arith.constant 0 : i32
    %c0_i32_2 = arith.constant 0 : i32
    return %c0_i32, %c0_i32_0, %c0_i32_1 : i32, i32, i32
  }
  func.func @transform_9(%arg0: i32) -> (i32, i32) {
    %c0_i32 = arith.constant 0 : i32
    %c0_i32_0 = arith.constant 0 : i32
    %c0_i32_1 = arith.constant 0 : i32
    return %c0_i32, %c0_i32_0 : i32, i32
  }
  func.func @transform_10(%arg0: i32) -> (i32, i32) {
    %c0_i32 = arith.constant 0 : i32
    %c0_i32_0 = arith.constant 0 : i32
    %c0_i32_1 = arith.constant 0 : i32
    return %c0_i32, %c0_i32_0 : i32, i32
  }
  func.func @transform_11(%arg0: i32) -> (i32, i32) {
    %c0_i32 = arith.constant 0 : i32
    %c0_i32_0 = arith.constant 0 : i32
    %c0_i32_1 = arith.constant 0 : i32
    return %c0_i32, %c0_i32_0 : i32, i32
  }
  func.func @transform_12(%arg0: i32) -> (i32, i32) {
    %c0_i32 = arith.constant 0 : i32
    %c0_i32_0 = arith.constant 0 : i32
    %c0_i32_1 = arith.constant 0 : i32
    return %c0_i32, %c0_i32_0 : i32, i32
  }
  func.func @transform_13(%arg0: i32) -> (i32, i32) {
    %c0_i32 = arith.constant 0 : i32
    %c0_i32_0 = arith.constant 0 : i32
    %c0_i32_1 = arith.constant 0 : i32
    return %c0_i32, %c0_i32_0 : i32, i32
  }
  func.func @transform_14(%arg0: i32) -> (i32, i32) {
    %c0_i32 = arith.constant 0 : i32
    %c0_i32_0 = arith.constant 0 : i32
    %c0_i32_1 = arith.constant 0 : i32
    return %c0_i32, %c0_i32_0 : i32, i32
  }
  func.func @transform_15(%arg0: i32) -> (i32, i32) {
    %c0_i32 = arith.constant 0 : i32
    %c0_i32_0 = arith.constant 0 : i32
    %c0_i32_1 = arith.constant 0 : i32
    return %c0_i32, %c0_i32_0 : i32, i32
  }
  func.func @transform_16(%arg0: i32) -> (i32, i32) {
    %c0_i32 = arith.constant 0 : i32
    %c0_i32_0 = arith.constant 0 : i32
    %c0_i32_1 = arith.constant 0 : i32
    return %c0_i32, %c0_i32_0 : i32, i32
  }
  func.func @transform_17(%arg0: i32) -> (i32, i32) {
    %c0_i32 = arith.constant 0 : i32
    %c0_i32_0 = arith.constant 0 : i32
    %c0_i32_1 = arith.constant 0 : i32
    return %c0_i32, %c0_i32_0 : i32, i32
  }
  func.func @transform_18(%arg0: i32) -> (i32, i32) {
    %c0_i32 = arith.constant 0 : i32
    %c0_i32_0 = arith.constant 0 : i32
    %c0_i32_1 = arith.constant 0 : i32
    return %c0_i32, %c0_i32_0 : i32, i32
  }
  func.func @transform_19(%arg0: i32) -> (i32, i32) {
    %c0_i32 = arith.constant 0 : i32
    %c0_i32_0 = arith.constant 0 : i32
    %c0_i32_1 = arith.constant 0 : i32
    return %c0_i32, %c0_i32_0 : i32, i32
  }
  func.func @transform_20(%arg0: i32) -> (i32, i32) {
    %c0_i32 = arith.constant 0 : i32
    %c0_i32_0 = arith.constant 0 : i32
    %c0_i32_1 = arith.constant 0 : i32
    return %c0_i32, %c0_i32_0 : i32, i32
  }
  func.func @transform_21(%arg0: i32) -> (i32, i32) {
    %c0_i32 = arith.constant 0 : i32
    %c0_i32_0 = arith.constant 0 : i32
    %c0_i32_1 = arith.constant 0 : i32
    return %c0_i32, %c0_i32_0 : i32, i32
  }
  func.func @transform_22(%arg0: i32) -> (i32, i32) {
    %c0_i32 = arith.constant 0 : i32
    %c0_i32_0 = arith.constant 0 : i32
    return %arg0, %c0_i32 : i32, i32
  }
}

</mosaic_0001>

<llo_original>
// kernel: autostf_forward.1
$region0: #{autostf_forward.1}
  #allocation0 [shape = 'u32[]', space=smem, size = 0x4, offset = 0x4, fixed_abs, tag = 'smem constant byte address 0x4 - core index']
  #allocation1 [shape = 'u32[144,128]{1,0:T(1,128)}', space=vmem, size = 0x12000, scoped, tag = 'internal scratch']
  %s0 = inlined_call_operand.vmem [shape: f32[32,24], index: 0, kind: input, shape index: {}]
  %s1 = inlined_call_operand.vmem [shape: f32[32,128], index: 1, kind: input, shape index: {}]
  %s2 = inlined_call_operand.vmem [shape: f32[32,8], index: 2, kind: input, shape index: {}]
  %s3 = inlined_call_operand.vmem [shape: f32[24,128], index: 3, kind: input, shape index: {}]
  %s4 = inlined_call_operand.vmem [shape: f32[1,128], index: 4, kind: input, shape index: {}]
  %s5 = inlined_call_operand.vmem [shape: f32[2,128,128], index: 5, kind: input, shape index: {}]
  %s6 = inlined_call_operand.vmem [shape: f32[2,1,128], index: 6, kind: input, shape index: {}]
  %s7 = inlined_call_operand.vmem [shape: f32[2,128,128], index: 7, kind: input, shape index: {}]
  %s8 = inlined_call_operand.vmem [shape: f32[2,1,128], index: 8, kind: input, shape index: {}]
  %s9 = inlined_call_operand.vmem [shape: f32[128,32], index: 9, kind: input, shape index: {}]
  %s10 = inlined_call_operand.vmem [shape: f32[1,32], index: 10, kind: input, shape index: {}]
  %s11 = inlined_call_operand.vmem [shape: f32[1,32], index: 11, kind: input, shape index: {}]
  %s12 = inlined_call_operand.vmem [shape: f32[8,2], index: 12, kind: input, shape index: {}]
  %s13 = inlined_call_operand.vmem [shape: f32[1,32], index: 13, kind: input, shape index: {}]
  %s14 = inlined_call_operand.vmem [shape: f32[64,32], index: 14, kind: input, shape index: {}]
  %s15 = inlined_call_operand.vmem [shape: f32[1,32], index: 15, kind: input, shape index: {}]
  %s16 = inlined_call_operand.vmem [shape: f32[64,32], index: 16, kind: input, shape index: {}]
  %s17 = inlined_call_operand.vmem [shape: f32[1,32], index: 17, kind: input, shape index: {}]
  %s18 = inlined_call_operand.vmem [shape: f32[64,64], index: 18, kind: input, shape index: {}]
  %s19 = inlined_call_operand.vmem [shape: f32[1,64], index: 19, kind: input, shape index: {}]
  %s20 = inlined_call_operand.vmem [shape: f32[64,128], index: 20, kind: input, shape index: {}]
  %s21 = inlined_call_operand.vmem [shape: f32[1,128], index: 21, kind: input, shape index: {}]
  %s22 = inlined_call_operand.vmem [shape: f32[32,128], index: 22, kind: output, shape index: {}]
  %s23 = sld [smem:[#allocation0]]
  $region98: #{autostf_forward.1} parent=0
    _
  %s25 = ssub.s32 1, %s23
  %s26 = scalar_select 0, %s25, %s23
  // Predicated region
  $region2: #{autostf_forward.1} parent=0 // pred_check
    _
  $region3: #{autostf_forward.1} parent=0 // pred_check_branch
    %28 = sbr.rel (0) target = $region5
  $region4: #{autostf_forward.1} parent=0 // pred_region
    _
  $region5: #{autostf_forward.1} parent=0 // pred_fallthru
    _
  // Predicated region
  $region6: #{autostf_forward.1} parent=0 // pred_check
    _
  $region7: #{autostf_forward.1} parent=0 // pred_check_branch
    %30 = sbr.rel (0) target = $region9
  $region8: #{autostf_forward.1} parent=0 // pred_region
    _
  $region9: #{autostf_forward.1} parent=0 // pred_fallthru
    _
  // Predicated region
  $region10: #{autostf_forward.1} parent=0 // pred_check
    _
  $region11: #{autostf_forward.1} parent=0 // pred_check_branch
    %32 = sbr.rel (0) target = $region13
  $region12: #{autostf_forward.1} parent=0 // pred_region
    _
  $region13: #{autostf_forward.1} parent=0 // pred_fallthru
    _
  // Predicated region
  $region14: #{autostf_forward.1} parent=0 // pred_check
    _
  $region15: #{autostf_forward.1} parent=0 // pred_check_branch
    %34 = sbr.rel (0) target = $region17
  $region16: #{autostf_forward.1} parent=0 // pred_region
    _
  $region17: #{autostf_forward.1} parent=0 // pred_fallthru
    _
  // Predicated region
  $region18: #{autostf_forward.1} parent=0 // pred_check
    _
  $region19: #{autostf_forward.1} parent=0 // pred_check_branch
    %36 = sbr.rel (0) target = $region21
  $region20: #{autostf_forward.1} parent=0 // pred_region
    _
  $region21: #{autostf_forward.1} parent=0 // pred_fallthru
    _
  // Predicated region
  $region22: #{autostf_forward.1} parent=0 // pred_check
    _
  $region23: #{autostf_forward.1} parent=0 // pred_check_branch
    %38 = sbr.rel (0) target = $region25
  $region24: #{autostf_forward.1} parent=0 // pred_region
    _
  $region25: #{autostf_forward.1} parent=0 // pred_fallthru
    _
  // Predicated region
  $region26: #{autostf_forward.1} parent=0 // pred_check
    _
  $region27: #{autostf_forward.1} parent=0 // pred_check_branch
    %40 = sbr.rel (0) target = $region29
  $region28: #{autostf_forward.1} parent=0 // pred_region
    _
  $region29: #{autostf_forward.1} parent=0 // pred_fallthru
    _
  // Predicated region
  $region30: #{autostf_forward.1} parent=0 // pred_check
    _
  $region31: #{autostf_forward.1} parent=0 // pred_check_branch
    %42 = sbr.rel (0) target = $region33
  $region32: #{autostf_forward.1} parent=0 // pred_region
    _
  $region33: #{autostf_forward.1} parent=0 // pred_fallthru
    _
  // Predicated region
  $region34: #{autostf_forward.1} parent=0 // pred_check
    _
  $region35: #{autostf_forward.1} parent=0 // pred_check_branch
    %44 = sbr.rel (0) target = $region37
  $region36: #{autostf_forward.1} parent=0 // pred_region
    _
  $region37: #{autostf_forward.1} parent=0 // pred_fallthru
    _
  // Predicated region
  $region38: #{autostf_forward.1} parent=0 // pred_check
    _
  $region39: #{autostf_forward.1} parent=0 // pred_check_branch
    %46 = sbr.rel (0) target = $region41
  $region40: #{autostf_forward.1} parent=0 // pred_region
    _
  $region41: #{autostf_forward.1} parent=0 // pred_fallthru
    _
  // Predicated region
  $region42: #{autostf_forward.1} parent=0 // pred_check
    _
  $region43: #{autostf_forward.1} parent=0 // pred_check_branch
    %48 = sbr.rel (0) target = $region45
  $region44: #{autostf_forward.1} parent=0 // pred_region
    _
  $region45: #{autostf_forward.1} parent=0 // pred_fallthru
    _
  // Predicated region
  $region46: #{autostf_forward.1} parent=0 // pred_check
    _
  $region47: #{autostf_forward.1} parent=0 // pred_check_branch
    %50 = sbr.rel (0) target = $region49
  $region48: #{autostf_forward.1} parent=0 // pred_region
    _
  $region49: #{autostf_forward.1} parent=0 // pred_fallthru
    _
  // Predicated region
  $region50: #{autostf_forward.1} parent=0 // pred_check
    _
  $region51: #{autostf_forward.1} parent=0 // pred_check_branch
    %52 = sbr.rel (0) target = $region53
  $region52: #{autostf_forward.1} parent=0 // pred_region
    _
  $region53: #{autostf_forward.1} parent=0 // pred_fallthru
    _
  // Predicated region
  $region54: #{autostf_forward.1} parent=0 // pred_check
    _
  $region55: #{autostf_forward.1} parent=0 // pred_check_branch
    %54 = sbr.rel (0) target = $region57
  $region56: #{autostf_forward.1} parent=0 // pred_region
    _
  $region57: #{autostf_forward.1} parent=0 // pred_fallthru
    _
  // Predicated region
  $region58: #{autostf_forward.1} parent=0 // pred_check
    _
  $region59: #{autostf_forward.1} parent=0 // pred_check_branch
    %56 = sbr.rel (0) target = $region61
  $region60: #{autostf_forward.1} parent=0 // pred_region
    _
  $region61: #{autostf_forward.1} parent=0 // pred_fallthru
    _
  // Predicated region
  $region62: #{autostf_forward.1} parent=0 // pred_check
    _
  $region63: #{autostf_forward.1} parent=0 // pred_check_branch
    %58 = sbr.rel (0) target = $region65
  $region64: #{autostf_forward.1} parent=0 // pred_region
    _
  $region65: #{autostf_forward.1} parent=0 // pred_fallthru
    _
  // Predicated region
  $region66: #{autostf_forward.1} parent=0 // pred_check
    _
  $region67: #{autostf_forward.1} parent=0 // pred_check_branch
    %60 = sbr.rel (0) target = $region69
  $region68: #{autostf_forward.1} parent=0 // pred_region
    _
  $region69: #{autostf_forward.1} parent=0 // pred_fallthru
    _
  // Predicated region
  $region70: #{autostf_forward.1} parent=0 // pred_check
    _
  $region71: #{autostf_forward.1} parent=0 // pred_check_branch
    %62 = sbr.rel (0) target = $region73
  $region72: #{autostf_forward.1} parent=0 // pred_region
    _
  $region73: #{autostf_forward.1} parent=0 // pred_fallthru
    _
  // Predicated region
  $region74: #{autostf_forward.1} parent=0 // pred_check
    _
  $region75: #{autostf_forward.1} parent=0 // pred_check_branch
    %64 = sbr.rel (0) target = $region77
  $region76: #{autostf_forward.1} parent=0 // pred_region
    _
  $region77: #{autostf_forward.1} parent=0 // pred_fallthru
    _
  // Predicated region
  $region78: #{autostf_forward.1} parent=0 // pred_check
    _
  $region79: #{autostf_forward.1} parent=0 // pred_check_branch
    %66 = sbr.rel (0) target = $region81
  $region80: #{autostf_forward.1} parent=0 // pred_region
    _
  $region81: #{autostf_forward.1} parent=0 // pred_fallthru
    _
  // Predicated region
  $region82: #{autostf_forward.1} parent=0 // pred_check
    _
  $region83: #{autostf_forward.1} parent=0 // pred_check_branch
    %68 = sbr.rel (0) target = $region85
  $region84: #{autostf_forward.1} parent=0 // pred_region
    _
  $region85: #{autostf_forward.1} parent=0 // pred_fallthru
    _
  // Predicated region
  $region86: #{autostf_forward.1} parent=0 // pred_check
    _
  $region87: #{autostf_forward.1} parent=0 // pred_check_branch
    %70 = sbr.rel (0) target = $region89
  $region88: #{autostf_forward.1} parent=0 // pred_region
    _
  $region89: #{autostf_forward.1} parent=0 // pred_fallthru
    _
  %v71 = vld [vmem:[%s0] sm:$0xff]
  %v72 = vld [vmem:[%s0 + $0x8] sm:$0xff]
  %v73 = vld [vmem:[%s0 + $0x10] sm:$0xff]
  %v74 = vld [vmem:[%s0 + $0x18] sm:$0xff]
  %v75 = vld [vmem:[%s3] sm:$0xff]
  %v76 = vld [vmem:[%s3 + $0x8] sm:$0xff]
  %v77 = vld [vmem:[%s3 + $0x10] sm:$0xff]
  %v78 = vld [vmem:[%s4] sm:$0x1]
  %v80 = vlaneseq
  %v81 = vshrl.u32 %v80, 7
  %v82 = vsub.s32 0, %v81
  %v83 = vrot.slane %v78, %v82
  %vm85 = vcmask 195584
  %v87 = vsel %vm85, %v71, 0
  %v90 = vsel %vm85, %v72, 0
  %v93 = vsel %vm85, %v73, 0
  %v96 = vsel %vm85, %v74, 0
  %98 = vmatprep.subr.mxu0 0.0
  %99 = vmatpush1.msra.mxu0 %v75
  %100 = vmatprep.subr.mxu0 0.0
  %101 = vmatpush1.msra.mxu0 %v76
  %102 = vmatprep.subr.mxu0 0.0
  %103 = vmatpush1.msra.mxu0 %v77
  %104 = vmatprep.subr.mxu0 0.0
  %105 = vmatpush1.msra.mxu0 0.0
  %106 = vmatprep.subr.mxu0 0.0
  %107 = vmatpush1.msra.mxu0 0.0
  %108 = vmatprep.subr.mxu0 0.0
  %109 = vmatpush1.msra.mxu0 0.0
  %110 = vmatprep.subr.mxu0 0.0
  %111 = vmatpush1.msra.mxu0 0.0
  %112 = vmatprep.subr.mxu0 0.0
  %113 = vmatpush1.msra.mxu0 0.0
  %114 = vmatprep.subr.mxu0 0.0
  %115 = vmatpush1.msra.mxu0 0.0
  %116 = vmatprep.subr.mxu0 0.0
  %117 = vmatpush1.msra.mxu0 0.0
  %118 = vmatprep.subr.mxu0 0.0
  %119 = vmatpush1.msra.mxu0 0.0
  %120 = vmatprep.subr.mxu0 0.0
  %121 = vmatpush1.msra.mxu0 0.0
  %122 = vmatprep.subr.mxu0 0.0
  %123 = vmatpush1.msra.mxu0 0.0
  %124 = vmatprep.subr.mxu0 0.0
  %125 = vmatpush1.msra.mxu0 0.0
  %126 = vmatprep.subr.mxu0 0.0
  %127 = vmatpush1.msra.mxu0 0.0
  %128 = vmatprep.subr.mxu0 0.0
  %129 = vmatpush1.msra.mxu0 0.0
  %130 = vmatprep.subr.mxu0 0.0
  %131 = vmatpush1.msra.mxu0 0.0
  %132 = vmatprep.subr.mxu0 0.0
  %133 = vmatpush1.msra.mxu0 0.0
  %134 = vmatprep.subr.mxu0 0.0
  %135 = vmatpush1.msra.mxu0 0.0
  %136 = vmatprep.subr.mxu0 0.0
  %137 = vmatpush1.msra.mxu0 0.0
  %138 = vmatprep.subr.mxu0 0.0
  %139 = vmatpush1.msra.mxu0 0.0
  %140 = vmatprep.subr.mxu0 0.0
  %141 = vmatpush1.msra.mxu0 0.0
  %142 = vmatprep.subr.mxu0 0.0
  %143 = vmatpush1.msra.mxu0 0.0
  %144 = vmatprep.subr.mxu0 0.0
  %145 = vmatpush1.msra.mxu0 0.0
  %146 = vmatprep.subr.mxu0 0.0
  %147 = vmatpush1.msra.mxu0 0.0
  %148 = vmatprep.subr.mxu0 0.0
  %149 = vmatpush1.msra.mxu0 0.0
  %150 = vmatprep.subr.mxu0 0.0
  %151 = vmatpush1.msra.mxu0 0.0
  %152 = vmatprep.subr.mxu0 0.0
  %153 = vmatpush1.msra.mxu0 0.0
  %154 = vmatprep.subr.mxu0 0.0
  %155 = vmatpush1.msra.mxu0 0.0
  %156 = vmatprep.subr.mxu0 0.0
  %157 = vmatpush1.msra.mxu0 0.0
  %158 = vmatprep.subr.mxu0 0.0
  %159 = vmatpush1.msra.mxu0 0.0
  %160 = vmatprep.subr.mxu0 0.0
  %161 = vmatpush1.msra.mxu0 0.0
  %162 = vmatprep.mubr.f32.mxu0 0.0
  %163 = vmatmul.mubr.f32.gmra.mrb[0].mxu0 %v87
  %v164 = vpop.f32.mrb[0].mxu0
  %v165 = vadd.f32 %v83, %v164
  %v166 = vpop.f32.mrb[0].mxu0
  %167 = vmatprep.mubr.f32.mxu0 0.0
  %168 = vmatmul.mubr.f32.gmra.mrb[0].mxu0 %v90
  %v169 = vpop.f32.mrb[0].mxu0
  %v170 = vadd.f32 %v83, %v169
  %v171 = vpop.f32.mrb[0].mxu0
  %172 = vmatprep.mubr.f32.mxu0 0.0
  %173 = vmatmul.mubr.f32.gmra.mrb[0].mxu0 %v93
  %v174 = vpop.f32.mrb[0].mxu0
  %v175 = vadd.f32 %v83, %v174
  %v176 = vpop.f32.mrb[0].mxu0
  %177 = vmatprep.mubr.f32.mxu0 0.0
  %178 = vmatmul.mubr.f32.gmra.mrb[0].mxu0 %v96
  %v179 = vpop.f32.mrb[0].mxu0
  %v180 = vadd.f32 %v83, %v179
  %v181 = vpop.f32.mrb[0].mxu0
  %182 = vdwg.mxu0
  %v183 = vld [vmem:[%s1] sm:$0xff]
  %v184 = vld [vmem:[%s1 + $0x8] sm:$0xff]
  %v185 = vld [vmem:[%s1 + $0x10] sm:$0xff]
  %v186 = vld [vmem:[%s1 + $0x18] sm:$0xff]
  %v187 = vadd.f32 %v165, %v183
  %v188 = vadd.f32 %v170, %v184
  %v189 = vadd.f32 %v175, %v185
  %v190 = vadd.f32 %v180, %v186
  %v191 = vld [vmem:[%s5] sm:$0xff]
  %v192 = vld [vmem:[%s5 + $0x8] sm:$0xff]
  %v193 = vld [vmem:[%s5 + $0x10] sm:$0xff]
  %v194 = vld [vmem:[%s5 + $0x18] sm:$0xff]
  %v195 = vld [vmem:[%s5 + $0x20] sm:$0xff]
  %v196 = vld [vmem:[%s5 + $0x28] sm:$0xff]
  %v197 = vld [vmem:[%s5 + $0x30] sm:$0xff]
  %v198 = vld [vmem:[%s5 + $0x38] sm:$0xff]
  %v199 = vld [vmem:[%s5 + $0x40] sm:$0xff]
  %v200 = vld [vmem:[%s5 + $0x48] sm:$0xff]
  %v201 = vld [vmem:[%s5 + $0x50] sm:$0xff]
  %v202 = vld [vmem:[%s5 + $0x58] sm:$0xff]
  %v203 = vld [vmem:[%s5 + $0x60] sm:$0xff]
  %v204 = vld [vmem:[%s5 + $0x68] sm:$0xff]
  %v205 = vld [vmem:[%s5 + $0x70] sm:$0xff]
  %v206 = vld [vmem:[%s5 + $0x78] sm:$0xff]
  %v207 = vld [vmem:[%s6] sm:$0x1]
  %v209 = vlaneseq
  %v210 = vshrl.u32 %v209, 7
  %v211 = vsub.s32 0, %v210
  %v212 = vrot.slane %v207, %v211
  %214 = vmatprep.subr.mxu0 0.0
  %215 = vmatpush1.msra.mxu0 %v191
  %216 = vmatprep.subr.mxu0 0.0
  %217 = vmatpush1.msra.mxu0 %v192
  %218 = vmatprep.subr.mxu0 0.0
  %219 = vmatpush1.msra.mxu0 %v193
  %220 = vmatprep.subr.mxu0 0.0
  %221 = vmatpush1.msra.mxu0 %v194
  %222 = vmatprep.subr.mxu0 0.0
  %223 = vmatpush1.msra.mxu0 %v195
  %224 = vmatprep.subr.mxu0 0.0
  %225 = vmatpush1.msra.mxu0 %v196
  %226 = vmatprep.subr.mxu0 0.0
  %227 = vmatpush1.msra.mxu0 %v197
  %228 = vmatprep.subr.mxu0 0.0
  %229 = vmatpush1.msra.mxu0 %v198
  %230 = vmatprep.subr.mxu0 0.0
  %231 = vmatpush1.msra.mxu0 %v199
  %232 = vmatprep.subr.mxu0 0.0
  %233 = vmatpush1.msra.mxu0 %v200
  %234 = vmatprep.subr.mxu0 0.0
  %235 = vmatpush1.msra.mxu0 %v201
  %236 = vmatprep.subr.mxu0 0.0
  %237 = vmatpush1.msra.mxu0 %v202
  %238 = vmatprep.subr.mxu0 0.0
  %239 = vmatpush1.msra.mxu0 %v203
  %240 = vmatprep.subr.mxu0 0.0
  %241 = vmatpush1.msra.mxu0 %v204
  %242 = vmatprep.subr.mxu0 0.0
  %243 = vmatpush1.msra.mxu0 %v205
  %244 = vmatprep.subr.mxu0 0.0
  %245 = vmatpush1.msra.mxu0 %v206
  %246 = vmatprep.subr.mxu0 0.0
  %247 = vmatpush1.msra.mxu0 0.0
  %248 = vmatprep.subr.mxu0 0.0
  %249 = vmatpush1.msra.mxu0 0.0
  %250 = vmatprep.subr.mxu0 0.0
  %251 = vmatpush1.msra.mxu0 0.0
  %252 = vmatprep.subr.mxu0 0.0
  %253 = vmatpush1.msra.mxu0 0.0
  %254 = vmatprep.subr.mxu0 0.0
  %255 = vmatpush1.msra.mxu0 0.0
  %256 = vmatprep.subr.mxu0 0.0
  %257 = vmatpush1.msra.mxu0 0.0
  %258 = vmatprep.subr.mxu0 0.0
  %259 = vmatpush1.msra.mxu0 0.0
  %260 = vmatprep.subr.mxu0 0.0
  %261 = vmatpush1.msra.mxu0 0.0
  %262 = vmatprep.subr.mxu0 0.0
  %263 = vmatpush1.msra.mxu0 0.0
  %264 = vmatprep.subr.mxu0 0.0
  %265 = vmatpush1.msra.mxu0 0.0
  %266 = vmatprep.subr.mxu0 0.0
  %267 = vmatpush1.msra.mxu0 0.0
  %268 = vmatprep.subr.mxu0 0.0
  %269 = vmatpush1.msra.mxu0 0.0
  %270 = vmatprep.subr.mxu0 0.0
  %271 = vmatpush1.msra.mxu0 0.0
  %272 = vmatprep.subr.mxu0 0.0
  %273 = vmatpush1.msra.mxu0 0.0
  %274 = vmatprep.subr.mxu0 0.0
  %275 = vmatpush1.msra.mxu0 0.0
  %276 = vmatprep.subr.mxu0 0.0
  %277 = vmatpush1.msra.mxu0 0.0
  %278 = vmatprep.mubr.f32.mxu0 0.0
  %279 = vmatmul.mubr.f32.gmra.mrb[0].mxu0 %v187
  %v280 = vpop.f32.mrb[0].mxu0
  %v281 = vadd.f32 %v212, %v280
  %v282 = vpop.f32.mrb[0].mxu0
  %283 = vmatprep.mubr.f32.mxu0 0.0
  %284 = vmatmul.mubr.f32.gmra.mrb[0].mxu0 %v188
  %v285 = vpop.f32.mrb[0].mxu0
  %v286 = vadd.f32 %v212, %v285
  %v287 = vpop.f32.mrb[0].mxu0
  %288 = vmatprep.mubr.f32.mxu0 0.0
  %289 = vmatmul.mubr.f32.gmra.mrb[0].mxu0 %v189
  %v290 = vpop.f32.mrb[0].mxu0
  %v291 = vadd.f32 %v212, %v290
  %v292 = vpop.f32.mrb[0].mxu0
  %293 = vmatprep.mubr.f32.mxu0 0.0
  %294 = vmatmul.mubr.f32.gmra.mrb[0].mxu0 %v190
  %v295 = vpop.f32.mrb[0].mxu0
  %v296 = vadd.f32 %v212, %v295
  %v297 = vpop.f32.mrb[0].mxu0
  %298 = vdwg.mxu0
  %v299 = vmax.f32 %v281, 0.0
  %v300 = vmax.f32 %v286, 0.0
  %v301 = vmax.f32 %v291, 0.0
  %v302 = vmax.f32 %v296, 0.0
  %v303 = vld [vmem:[%s7] sm:$0xff]
  %v304 = vld [vmem:[%s7 + $0x8] sm:$0xff]
  %v305 = vld [vmem:[%s7 + $0x10] sm:$0xff]
  %v306 = vld [vmem:[%s7 + $0x18] sm:$0xff]
  %v307 = vld [vmem:[%s7 + $0x20] sm:$0xff]
  %v308 = vld [vmem:[%s7 + $0x28] sm:$0xff]
  %v309 = vld [vmem:[%s7 + $0x30] sm:$0xff]
  %v310 = vld [vmem:[%s7 + $0x38] sm:$0xff]
  %v311 = vld [vmem:[%s7 + $0x40] sm:$0xff]
  %v312 = vld [vmem:[%s7 + $0x48] sm:$0xff]
  %v313 = vld [vmem:[%s7 + $0x50] sm:$0xff]
  %v314 = vld [vmem:[%s7 + $0x58] sm:$0xff]
  %v315 = vld [vmem:[%s7 + $0x60] sm:$0xff]
  %v316 = vld [vmem:[%s7 + $0x68] sm:$0xff]
  %v317 = vld [vmem:[%s7 + $0x70] sm:$0xff]
  %v318 = vld [vmem:[%s7 + $0x78] sm:$0xff]
  %v319 = vld [vmem:[%s8] sm:$0x1]
  %v321 = vlaneseq
  %v322 = vshrl.u32 %v321, 7
  %v323 = vsub.s32 0, %v322
  %v324 = vrot.slane %v319, %v323
  %326 = vmatprep.subr.mxu0 0.0
  %327 = vmatpush1.msra.mxu0 %v303
  %328 = vmatprep.subr.mxu0 0.0
  %329 = vmatpush1.msra.mxu0 %v304
  %330 = vmatprep.subr.mxu0 0.0
  %331 = vmatpush1.msra.mxu0 %v305
  %332 = vmatprep.subr.mxu0 0.0
  %333 = vmatpush1.msra.mxu0 %v306
  %334 = vmatprep.subr.mxu0 0.0
  %335 = vmatpush1.msra.mxu0 %v307
  %336 = vmatprep.subr.mxu0 0.0
  %337 = vmatpush1.msra.mxu0 %v308
  %338 = vmatprep.subr.mxu0 0.0
  %339 = vmatpush1.msra.mxu0 %v309
  %340 = vmatprep.subr.mxu0 0.0
  %341 = vmatpush1.msra.mxu0 %v310
  %342 = vmatprep.subr.mxu0 0.0
  %343 = vmatpush1.msra.mxu0 %v311
  %344 = vmatprep.subr.mxu0 0.0
  %345 = vmatpush1.msra.mxu0 %v312
  %346 = vmatprep.subr.mxu0 0.0
  %347 = vmatpush1.msra.mxu0 %v313
  %348 = vmatprep.subr.mxu0 0.0
  %349 = vmatpush1.msra.mxu0 %v314
  %350 = vmatprep.subr.mxu0 0.0
  %351 = vmatpush1.msra.mxu0 %v315
  %352 = vmatprep.subr.mxu0 0.0
  %353 = vmatpush1.msra.mxu0 %v316
  %354 = vmatprep.subr.mxu0 0.0
  %355 = vmatpush1.msra.mxu0 %v317
  %356 = vmatprep.subr.mxu0 0.0
  %357 = vmatpush1.msra.mxu0 %v318
  %358 = vmatprep.subr.mxu0 0.0
  %359 = vmatpush1.msra.mxu0 0.0
  %360 = vmatprep.subr.mxu0 0.0
  %361 = vmatpush1.msra.mxu0 0.0
  %362 = vmatprep.subr.mxu0 0.0
  %363 = vmatpush1.msra.mxu0 0.0
  %364 = vmatprep.subr.mxu0 0.0
  %365 = vmatpush1.msra.mxu0 0.0
  %366 = vmatprep.subr.mxu0 0.0
  %367 = vmatpush1.msra.mxu0 0.0
  %368 = vmatprep.subr.mxu0 0.0
  %369 = vmatpush1.msra.mxu0 0.0
  %370 = vmatprep.subr.mxu0 0.0
  %371 = vmatpush1.msra.mxu0 0.0
  %372 = vmatprep.subr.mxu0 0.0
  %373 = vmatpush1.msra.mxu0 0.0
  %374 = vmatprep.subr.mxu0 0.0
  %375 = vmatpush1.msra.mxu0 0.0
  %376 = vmatprep.subr.mxu0 0.0
  %377 = vmatpush1.msra.mxu0 0.0
  %378 = vmatprep.subr.mxu0 0.0
  %379 = vmatpush1.msra.mxu0 0.0
  %380 = vmatprep.subr.mxu0 0.0
  %381 = vmatpush1.msra.mxu0 0.0
  %382 = vmatprep.subr.mxu0 0.0
  %383 = vmatpush1.msra.mxu0 0.0
  %384 = vmatprep.subr.mxu0 0.0
  %385 = vmatpush1.msra.mxu0 0.0
  %386 = vmatprep.subr.mxu0 0.0
  %387 = vmatpush1.msra.mxu0 0.0
  %388 = vmatprep.subr.mxu0 0.0
  %389 = vmatpush1.msra.mxu0 0.0
  %390 = vmatprep.mubr.f32.mxu0 0.0
  %391 = vmatmul.mubr.f32.gmra.mrb[0].mxu0 %v299
  %v392 = vpop.f32.mrb[0].mxu0
  %v393 = vadd.f32 %v324, %v392
  %v394 = vpop.f32.mrb[0].mxu0
  %395 = vmatprep.mubr.f32.mxu0 0.0
  %396 = vmatmul.mubr.f32.gmra.mrb[0].mxu0 %v300
  %v397 = vpop.f32.mrb[0].mxu0
  %v398 = vadd.f32 %v324, %v397
  %v399 = vpop.f32.mrb[0].mxu0
  %400 = vmatprep.mubr.f32.mxu0 0.0
  %401 = vmatmul.mubr.f32.gmra.mrb[0].mxu0 %v301
  %v402 = vpop.f32.mrb[0].mxu0
  %v403 = vadd.f32 %v324, %v402
  %v404 = vpop.f32.mrb[0].mxu0
  %405 = vmatprep.mubr.f32.mxu0 0.0
  %406 = vmatmul.mubr.f32.gmra.mrb[0].mxu0 %v302
  %v407 = vpop.f32.mrb[0].mxu0
  %v408 = vadd.f32 %v324, %v407
  %v409 = vpop.f32.mrb[0].mxu0
  %410 = vdwg.mxu0
  %v411 = vadd.f32 %v393, %v187
  %v412 = vadd.f32 %v398, %v188
  %v413 = vadd.f32 %v403, %v189
  %v414 = vadd.f32 %v408, %v190
  %s415 = scalar_lea.vmem %s5, 128
  %v416 = vld [vmem:[%s415] sm:$0xff]
  %v417 = vld [vmem:[%s415 + $0x8] sm:$0xff]
  %v418 = vld [vmem:[%s415 + $0x10] sm:$0xff]
  %v419 = vld [vmem:[%s415 + $0x18] sm:$0xff]
  %v420 = vld [vmem:[%s415 + $0x20] sm:$0xff]
  %v421 = vld [vmem:[%s415 + $0x28] sm:$0xff]
  %v422 = vld [vmem:[%s415 + $0x30] sm:$0xff]
  %v423 = vld [vmem:[%s415 + $0x38] sm:$0xff]
  %v424 = vld [vmem:[%s415 + $0x40] sm:$0xff]
  %v425 = vld [vmem:[%s415 + $0x48] sm:$0xff]
  %v426 = vld [vmem:[%s415 + $0x50] sm:$0xff]
  %v427 = vld [vmem:[%s415 + $0x58] sm:$0xff]
  %v428 = vld [vmem:[%s415 + $0x60] sm:$0xff]
  %v429 = vld [vmem:[%s415 + $0x68] sm:$0xff]
  %v430 = vld [vmem:[%s415 + $0x70] sm:$0xff]
  %v431 = vld [vmem:[%s415 + $0x78] sm:$0xff]
  %s432 = scalar_lea.vmem %s6, 1
  %v433 = vld [vmem:[%s432] sm:$0x1]
  %v435 = vlaneseq
  %v436 = vshrl.u32 %v435, 7
  %v437 = vsub.s32 0, %v436
  %v438 = vrot.slane %v433, %v437
  %440 = vmatprep.subr.mxu0 0.0
  %441 = vmatpush1.msra.mxu0 %v416
  %442 = vmatprep.subr.mxu0 0.0
  %443 = vmatpush1.msra.mxu0 %v417
  %444 = vmatprep.subr.mxu0 0.0
  %445 = vmatpush1.msra.mxu0 %v418
  %446 = vmatprep.subr.mxu0 0.0
  %447 = vmatpush1.msra.mxu0 %v419
  %448 = vmatprep.subr.mxu0 0.0
  %449 = vmatpush1.msra.mxu0 %v420
  %450 = vmatprep.subr.mxu0 0.0
  %451 = vmatpush1.msra.mxu0 %v421
  %452 = vmatprep.subr.mxu0 0.0
  %453 = vmatpush1.msra.mxu0 %v422
  %454 = vmatprep.subr.mxu0 0.0
  %455 = vmatpush1.msra.mxu0 %v423
  %456 = vmatprep.subr.mxu0 0.0
  %457 = vmatpush1.msra.mxu0 %v424
  %458 = vmatprep.subr.mxu0 0.0
  %459 = vmatpush1.msra.mxu0 %v425
  %460 = vmatprep.subr.mxu0 0.0
  %461 = vmatpush1.msra.mxu0 %v426
  %462 = vmatprep.subr.mxu0 0.0
  %463 = vmatpush1.msra.mxu0 %v427
  %464 = vmatprep.subr.mxu0 0.0
  %465 = vmatpush1.msra.mxu0 %v428
  %466 = vmatprep.subr.mxu0 0.0
  %467 = vmatpush1.msra.mxu0 %v429
  %468 = vmatprep.subr.mxu0 0.0
  %469 = vmatpush1.msra.mxu0 %v430
  %470 = vmatprep.subr.mxu0 0.0
  %471 = vmatpush1.msra.mxu0 %v431
  %472 = vmatprep.subr.mxu0 0.0
  %473 = vmatpush1.msra.mxu0 0.0
  %474 = vmatprep.subr.mxu0 0.0
  %475 = vmatpush1.msra.mxu0 0.0
  %476 = vmatprep.subr.mxu0 0.0
  %477 = vmatpush1.msra.mxu0 0.0
  %478 = vmatprep.subr.mxu0 0.0
  %479 = vmatpush1.msra.mxu0 0.0
  %480 = vmatprep.subr.mxu0 0.0
  %481 = vmatpush1.msra.mxu0 0.0
  %482 = vmatprep.subr.mxu0 0.0
  %483 = vmatpush1.msra.mxu0 0.0
  %484 = vmatprep.subr.mxu0 0.0
  %485 = vmatpush1.msra.mxu0 0.0
  %486 = vmatprep.subr.mxu0 0.0
  %487 = vmatpush1.msra.mxu0 0.0
  %488 = vmatprep.subr.mxu0 0.0
  %489 = vmatpush1.msra.mxu0 0.0
  %490 = vmatprep.subr.mxu0 0.0
  %491 = vmatpush1.msra.mxu0 0.0
  %492 = vmatprep.subr.mxu0 0.0
  %493 = vmatpush1.msra.mxu0 0.0
  %494 = vmatprep.subr.mxu0 0.0
  %495 = vmatpush1.msra.mxu0 0.0
  %496 = vmatprep.subr.mxu0 0.0
  %497 = vmatpush1.msra.mxu0 0.0
  %498 = vmatprep.subr.mxu0 0.0
  %499 = vmatpush1.msra.mxu0 0.0
  %500 = vmatprep.subr.mxu0 0.0
  %501 = vmatpush1.msra.mxu0 0.0
  %502 = vmatprep.subr.mxu0 0.0
  %503 = vmatpush1.msra.mxu0 0.0
  %504 = vmatprep.mubr.f32.mxu0 0.0
  %505 = vmatmul.mubr.f32.gmra.mrb[0].mxu0 %v411
  %v506 = vpop.f32.mrb[0].mxu0
  %v507 = vadd.f32 %v438, %v506
  %v508 = vpop.f32.mrb[0].mxu0
  %509 = vmatprep.mubr.f32.mxu0 0.0
  %510 = vmatmul.mubr.f32.gmra.mrb[0].mxu0 %v412
  %v511 = vpop.f32.mrb[0].mxu0
  %v512 = vadd.f32 %v438, %v511
  %v513 = vpop.f32.mrb[0].mxu0
  %514 = vmatprep.mubr.f32.mxu0 0.0
  %515 = vmatmul.mubr.f32.gmra.mrb[0].mxu0 %v413
  %v516 = vpop.f32.mrb[0].mxu0
  %v517 = vadd.f32 %v438, %v516
  %v518 = vpop.f32.mrb[0].mxu0
  %519 = vmatprep.mubr.f32.mxu0 0.0
  %520 = vmatmul.mubr.f32.gmra.mrb[0].mxu0 %v414
  %v521 = vpop.f32.mrb[0].mxu0
  %v522 = vadd.f32 %v438, %v521
  %v523 = vpop.f32.mrb[0].mxu0
  %524 = vdwg.mxu0
  %v525 = vmax.f32 %v507, 0.0
  %v526 = vmax.f32 %v512, 0.0
  %v527 = vmax.f32 %v517, 0.0
  %v528 = vmax.f32 %v522, 0.0
  %s529 = scalar_lea.vmem %s7, 128
  %v530 = vld [vmem:[%s529] sm:$0xff]
  %v531 = vld [vmem:[%s529 + $0x8] sm:$0xff]
  %v532 = vld [vmem:[%s529 + $0x10] sm:$0xff]
  %v533 = vld [vmem:[%s529 + $0x18] sm:$0xff]
  %v534 = vld [vmem:[%s529 + $0x20] sm:$0xff]
  %v535 = vld [vmem:[%s529 + $0x28] sm:$0xff]
  %v536 = vld [vmem:[%s529 + $0x30] sm:$0xff]
  %v537 = vld [vmem:[%s529 + $0x38] sm:$0xff]
  %v538 = vld [vmem:[%s529 + $0x40] sm:$0xff]
  %v539 = vld [vmem:[%s529 + $0x48] sm:$0xff]
  %v540 = vld [vmem:[%s529 + $0x50] sm:$0xff]
  %v541 = vld [vmem:[%s529 + $0x58] sm:$0xff]
  %v542 = vld [vmem:[%s529 + $0x60] sm:$0xff]
  %v543 = vld [vmem:[%s529 + $0x68] sm:$0xff]
  %v544 = vld [vmem:[%s529 + $0x70] sm:$0xff]
  %v545 = vld [vmem:[%s529 + $0x78] sm:$0xff]
  %s546 = scalar_lea.vmem %s8, 1
  %v547 = vld [vmem:[%s546] sm:$0x1]
  %v549 = vlaneseq
  %v550 = vshrl.u32 %v549, 7
  %v551 = vsub.s32 0, %v550
  %v552 = vrot.slane %v547, %v551
  %554 = vmatprep.subr.mxu0 0.0
  %555 = vmatpush1.msra.mxu0 %v530
  %556 = vmatprep.subr.mxu0 0.0
  %557 = vmatpush1.msra.mxu0 %v531
  %558 = vmatprep.subr.mxu0 0.0
  %559 = vmatpush1.msra.mxu0 %v532
  %560 = vmatprep.subr.mxu0 0.0
  %561 = vmatpush1.msra.mxu0 %v533
  %562 = vmatprep.subr.mxu0 0.0
  %563 = vmatpush1.msra.mxu0 %v534
  %564 = vmatprep.subr.mxu0 0.0
  %565 = vmatpush1.msra.mxu0 %v535
  %566 = vmatprep.subr.mxu0 0.0
  %567 = vmatpush1.msra.mxu0 %v536
  %568 = vmatprep.subr.mxu0 0.0
  %569 = vmatpush1.msra.mxu0 %v537
  %570 = vmatprep.subr.mxu0 0.0
  %571 = vmatpush1.msra.mxu0 %v538
  %572 = vmatprep.subr.mxu0 0.0
  %573 = vmatpush1.msra.mxu0 %v539
  %574 = vmatprep.subr.mxu0 0.0
  %575 = vmatpush1.msra.mxu0 %v540
  %576 = vmatprep.subr.mxu0 0.0
  %577 = vmatpush1.msra.mxu0 %v541
  %578 = vmatprep.subr.mxu0 0.0
  %579 = vmatpush1.msra.mxu0 %v542
  %580 = vmatprep.subr.mxu0 0.0
  %581 = vmatpush1.msra.mxu0 %v543
  %582 = vmatprep.subr.mxu0 0.0
  %583 = vmatpush1.msra.mxu0 %v544
  %584 = vmatprep.subr.mxu0 0.0
  %585 = vmatpush1.msra.mxu0 %v545
  %586 = vmatprep.subr.mxu0 0.0
  %587 = vmatpush1.msra.mxu0 0.0
  %588 = vmatprep.subr.mxu0 0.0
  %589 = vmatpush1.msra.mxu0 0.0
  %590 = vmatprep.subr.mxu0 0.0
  %591 = vmatpush1.msra.mxu0 0.0
  %592 = vmatprep.subr.mxu0 0.0
  %593 = vmatpush1.msra.mxu0 0.0
  %594 = vmatprep.subr.mxu0 0.0
  %595 = vmatpush1.msra.mxu0 0.0
  %596 = vmatprep.subr.mxu0 0.0
  %597 = vmatpush1.msra.mxu0 0.0
  %598 = vmatprep.subr.mxu0 0.0
  %599 = vmatpush1.msra.mxu0 0.0
  %600 = vmatprep.subr.mxu0 0.0
  %601 = vmatpush1.msra.mxu0 0.0
  %602 = vmatprep.subr.mxu0 0.0
  %603 = vmatpush1.msra.mxu0 0.0
  %604 = vmatprep.subr.mxu0 0.0
  %605 = vmatpush1.msra.mxu0 0.0
  %606 = vmatprep.subr.mxu0 0.0
  %607 = vmatpush1.msra.mxu0 0.0
  %608 = vmatprep.subr.mxu0 0.0
  %609 = vmatpush1.msra.mxu0 0.0
  %610 = vmatprep.subr.mxu0 0.0
  %611 = vmatpush1.msra.mxu0 0.0
  %612 = vmatprep.subr.mxu0 0.0
  %613 = vmatpush1.msra.mxu0 0.0
  %614 = vmatprep.subr.mxu0 0.0
  %615 = vmatpush1.msra.mxu0 0.0
  %616 = vmatprep.subr.mxu0 0.0
  %617 = vmatpush1.msra.mxu0 0.0
  %618 = vmatprep.mubr.f32.mxu0 0.0
  %619 = vmatmul.mubr.f32.gmra.mrb[0].mxu0 %v525
  %v620 = vpop.f32.mrb[0].mxu0
  %v621 = vadd.f32 %v552, %v620
  %v622 = vpop.f32.mrb[0].mxu0
  %623 = vmatprep.mubr.f32.mxu0 0.0
  %624 = vmatmul.mubr.f32.gmra.mrb[0].mxu0 %v526
  %v625 = vpop.f32.mrb[0].mxu0
  %v626 = vadd.f32 %v552, %v625
  %v627 = vpop.f32.mrb[0].mxu0
  %628 = vmatprep.mubr.f32.mxu0 0.0
  %629 = vmatmul.mubr.f32.gmra.mrb[0].mxu0 %v527
  %v630 = vpop.f32.mrb[0].mxu0
  %v631 = vadd.f32 %v552, %v630
  %v632 = vpop.f32.mrb[0].mxu0
  %633 = vmatprep.mubr.f32.mxu0 0.0
  %634 = vmatmul.mubr.f32.gmra.mrb[0].mxu0 %v528
  %v635 = vpop.f32.mrb[0].mxu0
  %v636 = vadd.f32 %v552, %v635
  %v637 = vpop.f32.mrb[0].mxu0
  %638 = vdwg.mxu0
  %v639 = vadd.f32 %v621, %v411
  %v640 = vadd.f32 %v626, %v412
  %v641 = vadd.f32 %v631, %v413
  %v642 = vadd.f32 %v636, %v414
  %v643 = vld [vmem:[%s9] sm:$0xff]
  %v644 = vld [vmem:[%s9 + $0x8] sm:$0xff]
  %v645 = vld [vmem:[%s9 + $0x10] sm:$0xff]
  %v646 = vld [vmem:[%s9 + $0x18] sm:$0xff]
  %v647 = vld [vmem:[%s9 + $0x20] sm:$0xff]
  %v648 = vld [vmem:[%s9 + $0x28] sm:$0xff]
  %v649 = vld [vmem:[%s9 + $0x30] sm:$0xff]
  %v650 = vld [vmem:[%s9 + $0x38] sm:$0xff]
  %v651 = vld [vmem:[%s9 + $0x40] sm:$0xff]
  %v652 = vld [vmem:[%s9 + $0x48] sm:$0xff]
  %v653 = vld [vmem:[%s9 + $0x50] sm:$0xff]
  %v654 = vld [vmem:[%s9 + $0x58] sm:$0xff]
  %v655 = vld [vmem:[%s9 + $0x60] sm:$0xff]
  %v656 = vld [vmem:[%s9 + $0x68] sm:$0xff]
  %v657 = vld [vmem:[%s9 + $0x70] sm:$0xff]
  %v658 = vld [vmem:[%s9 + $0x78] sm:$0xff]
  %v659 = vld [vmem:[%s10] sm:$0x1]
  %v661 = vlaneseq
  %v662 = vshrl.u32 %v661, 7
  %v663 = vsub.s32 0, %v662
  %v664 = vrot.slane %v659, %v663
  %666 = vmatprep.subr.mxu0 0.0
  %667 = vmatpush1.msra.mxu0 %v643
  %668 = vmatprep.subr.mxu0 0.0
  %669 = vmatpush1.msra.mxu0 %v644
  %670 = vmatprep.subr.mxu0 0.0
  %671 = vmatpush1.msra.mxu0 %v645
  %672 = vmatprep.subr.mxu0 0.0
  %673 = vmatpush1.msra.mxu0 %v646
  %674 = vmatprep.subr.mxu0 0.0
  %675 = vmatpush1.msra.mxu0 %v647
  %676 = vmatprep.subr.mxu0 0.0
  %677 = vmatpush1.msra.mxu0 %v648
  %678 = vmatprep.subr.mxu0 0.0
  %679 = vmatpush1.msra.mxu0 %v649
  %680 = vmatprep.subr.mxu0 0.0
  %681 = vmatpush1.msra.mxu0 %v650
  %682 = vmatprep.subr.mxu0 0.0
  %683 = vmatpush1.msra.mxu0 %v651
  %684 = vmatprep.subr.mxu0 0.0
  %685 = vmatpush1.msra.mxu0 %v652
  %686 = vmatprep.subr.mxu0 0.0
  %687 = vmatpush1.msra.mxu0 %v653
  %688 = vmatprep.subr.mxu0 0.0
  %689 = vmatpush1.msra.mxu0 %v654
  %690 = vmatprep.subr.mxu0 0.0
  %691 = vmatpush1.msra.mxu0 %v655
  %692 = vmatprep.subr.mxu0 0.0
  %693 = vmatpush1.msra.mxu0 %v656
  %694 = vmatprep.subr.mxu0 0.0
  %695 = vmatpush1.msra.mxu0 %v657
  %696 = vmatprep.subr.mxu0 0.0
  %697 = vmatpush1.msra.mxu0 %v658
  %698 = vmatprep.subr.mxu0 0.0
  %699 = vmatpush1.msra.mxu0 0.0
  %700 = vmatprep.subr.mxu0 0.0
  %701 = vmatpush1.msra.mxu0 0.0
  %702 = vmatprep.subr.mxu0 0.0
  %703 = vmatpush1.msra.mxu0 0.0
  %704 = vmatprep.subr.mxu0 0.0
  %705 = vmatpush1.msra.mxu0 0.0
  %706 = vmatprep.subr.mxu0 0.0
  %707 = vmatpush1.msra.mxu0 0.0
  %708 = vmatprep.subr.mxu0 0.0
  %709 = vmatpush1.msra.mxu0 0.0
  %710 = vmatprep.subr.mxu0 0.0
  %711 = vmatpush1.msra.mxu0 0.0
  %712 = vmatprep.subr.mxu0 0.0
  %713 = vmatpush1.msra.mxu0 0.0
  %714 = vmatprep.subr.mxu0 0.0
  %715 = vmatpush1.msra.mxu0 0.0
  %716 = vmatprep.subr.mxu0 0.0
  %717 = vmatpush1.msra.mxu0 0.0
  %718 = vmatprep.subr.mxu0 0.0
  %719 = vmatpush1.msra.mxu0 0.0
  %720 = vmatprep.subr.mxu0 0.0
  %721 = vmatpush1.msra.mxu0 0.0
  %722 = vmatprep.subr.mxu0 0.0
  %723 = vmatpush1.msra.mxu0 0.0
  %724 = vmatprep.subr.mxu0 0.0
  %725 = vmatpush1.msra.mxu0 0.0
  %726 = vmatprep.subr.mxu0 0.0
  %727 = vmatpush1.msra.mxu0 0.0
  %728 = vmatprep.subr.mxu0 0.0
  %729 = vmatpush1.msra.mxu0 0.0
  %730 = vmatprep.mubr.f32.mxu0 0.0
  %731 = vmatmul.mubr.f32.gmra.mrb[0].mxu0 %v639
  %v732 = vpop.f32.mrb[0].mxu0
  %v733 = vadd.f32 %v664, %v732
  %v734 = vpop.f32.mrb[0].mxu0
  %735 = vmatprep.mubr.f32.mxu0 0.0
  %736 = vmatmul.mubr.f32.gmra.mrb[0].mxu0 %v640
  %v737 = vpop.f32.mrb[0].mxu0
  %v738 = vadd.f32 %v664, %v737
  %v739 = vpop.f32.mrb[0].mxu0
  %740 = vmatprep.mubr.f32.mxu0 0.0
  %741 = vmatmul.mubr.f32.gmra.mrb[0].mxu0 %v641
  %v742 = vpop.f32.mrb[0].mxu0
  %v743 = vadd.f32 %v664, %v742
  %v744 = vpop.f32.mrb[0].mxu0
  %745 = vmatprep.mubr.f32.mxu0 0.0
  %746 = vmatmul.mubr.f32.gmra.mrb[0].mxu0 %v642
  %v747 = vpop.f32.mrb[0].mxu0
  %v748 = vadd.f32 %v664, %v747
  %v749 = vpop.f32.mrb[0].mxu0
  %750 = vdwg.mxu0
  %v751 = vld [vmem:[%s2] sm:$0xff]
  %v752 = vld [vmem:[%s2 + $0x8] sm:$0xff]
  %v753 = vld [vmem:[%s2 + $0x10] sm:$0xff]
  %v754 = vld [vmem:[%s2 + $0x18] sm:$0xff]
  %v755 = vld [vmem:[%s12] sm:$0xff]
  %vm756 = vcmask 64512
  %v758 = vsel %vm756, %v751, 0
  %v761 = vsel %vm756, %v752, 0
  %v764 = vsel %vm756, %v753, 0
  %v767 = vsel %vm756, %v754, 0
  %769 = vmatprep.subr.mxu0 0.0
  %770 = vmatpush1.msra.mxu0 %v755
  %771 = vmatprep.subr.mxu0 0.0
  %772 = vmatpush1.msra.mxu0 0.0
  %773 = vmatprep.subr.mxu0 0.0
  %774 = vmatpush1.msra.mxu0 0.0
  %775 = vmatprep.subr.mxu0 0.0
  %776 = vmatpush1.msra.mxu0 0.0
  %777 = vmatprep.subr.mxu0 0.0
  %778 = vmatpush1.msra.mxu0 0.0
  %779 = vmatprep.subr.mxu0 0.0
  %780 = vmatpush1.msra.mxu0 0.0
  %781 = vmatprep.subr.mxu0 0.0
  %782 = vmatpush1.msra.mxu0 0.0
  %783 = vmatprep.subr.mxu0 0.0
  %784 = vmatpush1.msra.mxu0 0.0
  %785 = vmatprep.subr.mxu0 0.0
  %786 = vmatpush1.msra.mxu0 0.0
  %787 = vmatprep.subr.mxu0 0.0
  %788 = vmatpush1.msra.mxu0 0.0
  %789 = vmatprep.subr.mxu0 0.0
  %790 = vmatpush1.msra.mxu0 0.0
  %791 = vmatprep.subr.mxu0 0.0
  %792 = vmatpush1.msra.mxu0 0.0
  %793 = vmatprep.subr.mxu0 0.0
  %794 = vmatpush1.msra.mxu0 0.0
  %795 = vmatprep.subr.mxu0 0.0
  %796 = vmatpush1.msra.mxu0 0.0
  %797 = vmatprep.subr.mxu0 0.0
  %798 = vmatpush1.msra.mxu0 0.0
  %799 = vmatprep.subr.mxu0 0.0
  %800 = vmatpush1.msra.mxu0 0.0
  %801 = vmatprep.subr.mxu0 0.0
  %802 = vmatpush1.msra.mxu0 0.0
  %803 = vmatprep.subr.mxu0 0.0
  %804 = vmatpush1.msra.mxu0 0.0
  %805 = vmatprep.subr.mxu0 0.0
  %806 = vmatpush1.msra.mxu0 0.0
  %807 = vmatprep.subr.mxu0 0.0
  %808 = vmatpush1.msra.mxu0 0.0
  %809 = vmatprep.subr.mxu0 0.0
  %810 = vmatpush1.msra.mxu0 0.0
  %811 = vmatprep.subr.mxu0 0.0
  %812 = vmatpush1.msra.mxu0 0.0
  %813 = vmatprep.subr.mxu0 0.0
  %814 = vmatpush1.msra.mxu0 0.0
  %815 = vmatprep.subr.mxu0 0.0
  %816 = vmatpush1.msra.mxu0 0.0
  %817 = vmatprep.subr.mxu0 0.0
  %818 = vmatpush1.msra.mxu0 0.0
  %819 = vmatprep.subr.mxu0 0.0
  %820 = vmatpush1.msra.mxu0 0.0
  %821 = vmatprep.subr.mxu0 0.0
  %822 = vmatpush1.msra.mxu0 0.0
  %823 = vmatprep.subr.mxu0 0.0
  %824 = vmatpush1.msra.mxu0 0.0
  %825 = vmatprep.subr.mxu0 0.0
  %826 = vmatpush1.msra.mxu0 0.0
  %827 = vmatprep.subr.mxu0 0.0
  %828 = vmatpush1.msra.mxu0 0.0
  %829 = vmatprep.subr.mxu0 0.0
  %830 = vmatpush1.msra.mxu0 0.0
  %831 = vmatprep.subr.mxu0 0.0
  %832 = vmatpush1.msra.mxu0 0.0
  %833 = vmatprep.mubr.f32.mxu0 0.0
  %834 = vmatmul.mubr.f32.gmra.mrb[0].mxu0 %v758
  %v835 = vpop.f32.mrb[0].mxu0
  %v836 = vadd.f32 0.0, %v835
  %v837 = vpop.f32.mrb[0].mxu0
  %838 = vmatprep.mubr.f32.mxu0 0.0
  %839 = vmatmul.mubr.f32.gmra.mrb[0].mxu0 %v761
  %v840 = vpop.f32.mrb[0].mxu0
  %v841 = vadd.f32 0.0, %v840
  %v842 = vpop.f32.mrb[0].mxu0
  %843 = vmatprep.mubr.f32.mxu0 0.0
  %844 = vmatmul.mubr.f32.gmra.mrb[0].mxu0 %v764
  %v845 = vpop.f32.mrb[0].mxu0
  %v846 = vadd.f32 0.0, %v845
  %v847 = vpop.f32.mrb[0].mxu0
  %848 = vmatprep.mubr.f32.mxu0 0.0
  %849 = vmatmul.mubr.f32.gmra.mrb[0].mxu0 %v767
  %v850 = vpop.f32.mrb[0].mxu0
  %v851 = vadd.f32 0.0, %v850
  %v852 = vpop.f32.mrb[0].mxu0
  %853 = vdwg.mxu0
  %v854 = vld [vmem:[%s11] sm:$0x1]
  %v855 = vld [vmem:[%s13] sm:$0x1]
  %v856 = vld [vmem:[%s14] sm:$0xff]
  %v857 = vld [vmem:[%s14 + $0x8] sm:$0xff]
  %v858 = vld [vmem:[%s14 + $0x10] sm:$0xff]
  %v859 = vld [vmem:[%s14 + $0x18] sm:$0xff]
  %v860 = vld [vmem:[%s14 + $0x20] sm:$0xff]
  %v861 = vld [vmem:[%s14 + $0x28] sm:$0xff]
  %v862 = vld [vmem:[%s14 + $0x30] sm:$0xff]
  %v863 = vld [vmem:[%s14 + $0x38] sm:$0xff]
  %v864 = vld [vmem:[%s16] sm:$0xff]
  %v865 = vld [vmem:[%s16 + $0x8] sm:$0xff]
  %v866 = vld [vmem:[%s16 + $0x10] sm:$0xff]
  %v867 = vld [vmem:[%s16 + $0x18] sm:$0xff]
  %v868 = vld [vmem:[%s16 + $0x20] sm:$0xff]
  %v869 = vld [vmem:[%s16 + $0x28] sm:$0xff]
  %v870 = vld [vmem:[%s16 + $0x30] sm:$0xff]
  %v871 = vld [vmem:[%s16 + $0x38] sm:$0xff]
  %v872 = vld [vmem:[%s15] sm:$0x1]
  %v874 = vlaneseq
  %v875 = vshrl.u32 %v874, 7
  %v876 = vsub.s32 0, %v875
  %v877 = vrot.slane %v872, %v876
  %vm879 = vcmask 261120
  %v881 = vsel %vm879, %v733, 0
  %v884 = vsel %vm879, %v738, 0
  %v887 = vsel %vm879, %v743, 0
  %v890 = vsel %vm879, %v748, 0
  %892 = vmatprep.subr.mxu0 0.0
  %893 = vmatpush1.msra.mxu0 %v856
  %894 = vmatprep.subr.mxu0 0.0
  %895 = vmatpush1.msra.mxu0 %v857
  %896 = vmatprep.subr.mxu0 0.0
  %897 = vmatpush1.msra.mxu0 %v858
  %898 = vmatprep.subr.mxu0 0.0
  %899 = vmatpush1.msra.mxu0 %v859
  %900 = vmatprep.subr.mxu0 0.0
  %901 = vmatpush1.msra.mxu0 0.0
  %902 = vmatprep.subr.mxu0 0.0
  %903 = vmatpush1.msra.mxu0 0.0
  %904 = vmatprep.subr.mxu0 0.0
  %905 = vmatpush1.msra.mxu0 0.0
  %906 = vmatprep.subr.mxu0 0.0
  %907 = vmatpush1.msra.mxu0 0.0
  %908 = vmatprep.subr.mxu0 0.0
  %909 = vmatpush1.msra.mxu0 0.0
  %910 = vmatprep.subr.mxu0 0.0
  %911 = vmatpush1.msra.mxu0 0.0
  %912 = vmatprep.subr.mxu0 0.0
  %913 = vmatpush1.msra.mxu0 0.0
  %914 = vmatprep.subr.mxu0 0.0
  %915 = vmatpush1.msra.mxu0 0.0
  %916 = vmatprep.subr.mxu0 0.0
  %917 = vmatpush1.msra.mxu0 0.0
  %918 = vmatprep.subr.mxu0 0.0
  %919 = vmatpush1.msra.mxu0 0.0
  %920 = vmatprep.subr.mxu0 0.0
  %921 = vmatpush1.msra.mxu0 0.0
  %922 = vmatprep.subr.mxu0 0.0
  %923 = vmatpush1.msra.mxu0 0.0
  %924 = vmatprep.subr.mxu0 0.0
  %925 = vmatpush1.msra.mxu0 0.0
  %926 = vmatprep.subr.mxu0 0.0
  %927 = vmatpush1.msra.mxu0 0.0
  %928 = vmatprep.subr.mxu0 0.0
  %929 = vmatpush1.msra.mxu0 0.0
  %930 = vmatprep.subr.mxu0 0.0
  %931 = vmatpush1.msra.mxu0 0.0
  %932 = vmatprep.subr.mxu0 0.0
  %933 = vmatpush1.msra.mxu0 0.0
  %934 = vmatprep.subr.mxu0 0.0
  %935 = vmatpush1.msra.mxu0 0.0
  %936 = vmatprep.subr.mxu0 0.0
  %937 = vmatpush1.msra.mxu0 0.0
  %938 = vmatprep.subr.mxu0 0.0
  %939 = vmatpush1.msra.mxu0 0.0
  %940 = vmatprep.subr.mxu0 0.0
  %941 = vmatpush1.msra.mxu0 0.0
  %942 = vmatprep.subr.mxu0 0.0
  %943 = vmatpush1.msra.mxu0 0.0
  %944 = vmatprep.subr.mxu0 0.0
  %945 = vmatpush1.msra.mxu0 0.0
  %946 = vmatprep.subr.mxu0 0.0
  %947 = vmatpush1.msra.mxu0 0.0
  %948 = vmatprep.subr.mxu0 0.0
  %949 = vmatpush1.msra.mxu0 0.0
  %950 = vmatprep.subr.mxu0 0.0
  %951 = vmatpush1.msra.mxu0 0.0
  %952 = vmatprep.subr.mxu0 0.0
  %953 = vmatpush1.msra.mxu0 0.0
  %954 = vmatprep.subr.mxu0 0.0
  %955 = vmatpush1.msra.mxu0 0.0
  %956 = vmatprep.mubr.f32.mxu0 0.0
  %957 = vmatmul.mubr.f32.gmra.mrb[0].mxu0 %v881
  %v958 = vpop.f32.mrb[0].mxu0
  %v959 = vadd.f32 %v877, %v958
  %v960 = vpop.f32.mrb[0].mxu0
  %961 = vmatprep.mubr.f32.mxu0 0.0
  %962 = vmatmul.mubr.f32.gmra.mrb[0].mxu0 %v884
  %v963 = vpop.f32.mrb[0].mxu0
  %v964 = vadd.f32 %v877, %v963
  %v965 = vpop.f32.mrb[0].mxu0
  %966 = vmatprep.mubr.f32.mxu0 0.0
  %967 = vmatmul.mubr.f32.gmra.mrb[0].mxu0 %v887
  %v968 = vpop.f32.mrb[0].mxu0
  %v969 = vadd.f32 %v877, %v968
  %v970 = vpop.f32.mrb[0].mxu0
  %971 = vmatprep.mubr.f32.mxu0 0.0
  %972 = vmatmul.mubr.f32.gmra.mrb[0].mxu0 %v890
  %v973 = vpop.f32.mrb[0].mxu0
  %v974 = vadd.f32 %v877, %v973
  %v975 = vpop.f32.mrb[0].mxu0
  %976 = vdwg.mxu0
  %978 = vset.pattern.permute.xlu0 0
  %979 = vperm.xlu0 %978, %v836
  %v980 = vpop.permute.xlu0 %979
  %983 = vset.pattern.permute.xlu0 0
  %984 = vperm.xlu0 %983, %v841
  %v985 = vpop.permute.xlu0 %984
  %988 = vset.pattern.permute.xlu0 0
  %989 = vperm.xlu0 %988, %v846
  %v990 = vpop.permute.xlu0 %989
  %993 = vset.pattern.permute.xlu0 0
  %994 = vperm.xlu0 %993, %v851
  %v995 = vpop.permute.xlu0 %994
  %v998 = vlaneseq
  %v999 = vshrl.u32 %v998, 7
  %v1000 = vsub.s32 0, %v999
  %v1001 = vrot.slane %v854, %v1000
  %v1003 = vmul.f32 %v980, %v1001
  %v1004 = vmul.f32 %v985, %v1001
  %v1005 = vmul.f32 %v990, %v1001
  %v1006 = vmul.f32 %v995, %v1001
  %v1008 = vlaneseq
  %v1009 = vshrl.u32 %v1008, 7
  %v1010 = vsub.s32 0, %v1009
  %v1011 = vrot.slane %v855, %v1010
  %v1013 = vadd.f32 %v1003, %v1011
  %v1014 = vadd.f32 %v1004, %v1011
  %v1015 = vadd.f32 %v1005, %v1011
  %v1016 = vadd.f32 %v1006, %v1011
  %v1018 = vsel %vm879, %v1013, 0
  %v1021 = vsel %vm879, %v1014, 0
  %v1024 = vsel %vm879, %v1015, 0
  %v1027 = vsel %vm879, %v1016, 0
  %1029 = vmatprep.subr.mxu0 0.0
  %1030 = vmatpush1.msra.mxu0 %v860
  %1031 = vmatprep.subr.mxu0 0.0
  %1032 = vmatpush1.msra.mxu0 %v861
  %1033 = vmatprep.subr.mxu0 0.0
  %1034 = vmatpush1.msra.mxu0 %v862
  %1035 = vmatprep.subr.mxu0 0.0
  %1036 = vmatpush1.msra.mxu0 %v863
  %1037 = vmatprep.subr.mxu0 0.0
  %1038 = vmatpush1.msra.mxu0 0.0
  %1039 = vmatprep.subr.mxu0 0.0
  %1040 = vmatpush1.msra.mxu0 0.0
  %1041 = vmatprep.subr.mxu0 0.0
  %1042 = vmatpush1.msra.mxu0 0.0
  %1043 = vmatprep.subr.mxu0 0.0
  %1044 = vmatpush1.msra.mxu0 0.0
  %1045 = vmatprep.subr.mxu0 0.0
  %1046 = vmatpush1.msra.mxu0 0.0
  %1047 = vmatprep.subr.mxu0 0.0
  %1048 = vmatpush1.msra.mxu0 0.0
  %1049 = vmatprep.subr.mxu0 0.0
  %1050 = vmatpush1.msra.mxu0 0.0
  %1051 = vmatprep.subr.mxu0 0.0
  %1052 = vmatpush1.msra.mxu0 0.0
  %1053 = vmatprep.subr.mxu0 0.0
  %1054 = vmatpush1.msra.mxu0 0.0
  %1055 = vmatprep.subr.mxu0 0.0
  %1056 = vmatpush1.msra.mxu0 0.0
  %1057 = vmatprep.subr.mxu0 0.0
  %1058 = vmatpush1.msra.mxu0 0.0
  %1059 = vmatprep.subr.mxu0 0.0
  %1060 = vmatpush1.msra.mxu0 0.0
  %1061 = vmatprep.subr.mxu0 0.0
  %1062 = vmatpush1.msra.mxu0 0.0
  %1063 = vmatprep.subr.mxu0 0.0
  %1064 = vmatpush1.msra.mxu0 0.0
  %1065 = vmatprep.subr.mxu0 0.0
  %1066 = vmatpush1.msra.mxu0 0.0
  %1067 = vmatprep.subr.mxu0 0.0
  %1068 = vmatpush1.msra.mxu0 0.0
  %1069 = vmatprep.subr.mxu0 0.0
  %1070 = vmatpush1.msra.mxu0 0.0
  %1071 = vmatprep.subr.mxu0 0.0
  %1072 = vmatpush1.msra.mxu0 0.0
  %1073 = vmatprep.subr.mxu0 0.0
  %1074 = vmatpush1.msra.mxu0 0.0
  %1075 = vmatprep.subr.mxu0 0.0
  %1076 = vmatpush1.msra.mxu0 0.0
  %1077 = vmatprep.subr.mxu0 0.0
  %1078 = vmatpush1.msra.mxu0 0.0
  %1079 = vmatprep.subr.mxu0 0.0
  %1080 = vmatpush1.msra.mxu0 0.0
  %1081 = vmatprep.subr.mxu0 0.0
  %1082 = vmatpush1.msra.mxu0 0.0
  %1083 = vmatprep.subr.mxu0 0.0
  %1084 = vmatpush1.msra.mxu0 0.0
  %1085 = vmatprep.subr.mxu0 0.0
  %1086 = vmatpush1.msra.mxu0 0.0
  %1087 = vmatprep.subr.mxu0 0.0
  %1088 = vmatpush1.msra.mxu0 0.0
  %1089 = vmatprep.subr.mxu0 0.0
  %1090 = vmatpush1.msra.mxu0 0.0
  %1091 = vmatprep.subr.mxu0 0.0
  %1092 = vmatpush1.msra.mxu0 0.0
  %1093 = vmatprep.mubr.f32.mxu0 0.0
  %1094 = vmatmul.mubr.f32.gmra.mrb[0].mxu0 %v1018
  %v1095 = vpop.f32.mrb[0].mxu0
  %v1096 = vadd.f32 0.0, %v1095
  %v1097 = vpop.f32.mrb[0].mxu0
  %1098 = vmatprep.mubr.f32.mxu0 0.0
  %1099 = vmatmul.mubr.f32.gmra.mrb[0].mxu0 %v1021
  %v1100 = vpop.f32.mrb[0].mxu0
  %v1101 = vadd.f32 0.0, %v1100
  %v1102 = vpop.f32.mrb[0].mxu0
  %1103 = vmatprep.mubr.f32.mxu0 0.0
  %1104 = vmatmul.mubr.f32.gmra.mrb[0].mxu0 %v1024
  %v1105 = vpop.f32.mrb[0].mxu0
  %v1106 = vadd.f32 0.0, %v1105
  %v1107 = vpop.f32.mrb[0].mxu0
  %1108 = vmatprep.mubr.f32.mxu0 0.0
  %1109 = vmatmul.mubr.f32.gmra.mrb[0].mxu0 %v1027
  %v1110 = vpop.f32.mrb[0].mxu0
  %v1111 = vadd.f32 0.0, %v1110
  %v1112 = vpop.f32.mrb[0].mxu0
  %1113 = vdwg.mxu0
  %v1114 = vadd.f32 %v959, %v1096
  %v1115 = vadd.f32 %v964, %v1101
  %v1116 = vadd.f32 %v969, %v1106
  %v1117 = vadd.f32 %v974, %v1111
  %1118 = vset.pattern.permute.xlu0 1
  %1119 = vperm.xlu0 %1118, %v836
  %v1120 = vpop.permute.xlu0 %1119
  %1122 = vset.pattern.permute.xlu0 1
  %1123 = vperm.xlu0 %1122, %v841
  %v1124 = vpop.permute.xlu0 %1123
  %1126 = vset.pattern.permute.xlu0 1
  %1127 = vperm.xlu0 %1126, %v846
  %v1128 = vpop.permute.xlu0 %1127
  %1130 = vset.pattern.permute.xlu0 1
  %1131 = vperm.xlu0 %1130, %v851
  %v1132 = vpop.permute.xlu0 %1131
  %v1134 = vmul.f32 %v1120, %v1001
  %v1135 = vmul.f32 %v1124, %v1001
  %v1136 = vmul.f32 %v1128, %v1001
  %v1137 = vmul.f32 %v1132, %v1001
  %v1138 = vadd.f32 %v1134, %v1011
  %v1139 = vadd.f32 %v1135, %v1011
  %v1140 = vadd.f32 %v1136, %v1011
  %v1141 = vadd.f32 %v1137, %v1011
  %v1143 = vsel %vm879, %v1138, 0
  %v1146 = vsel %vm879, %v1139, 0
  %v1149 = vsel %vm879, %v1140, 0
  %v1152 = vsel %vm879, %v1141, 0
  %1154 = vmatprep.subr.mxu0 0.0
  %1155 = vmatpush1.msra.mxu0 %v860
  %1156 = vmatprep.subr.mxu0 0.0
  %1157 = vmatpush1.msra.mxu0 %v861
  %1158 = vmatprep.subr.mxu0 0.0
  %1159 = vmatpush1.msra.mxu0 %v862
  %1160 = vmatprep.subr.mxu0 0.0
  %1161 = vmatpush1.msra.mxu0 %v863
  %1162 = vmatprep.subr.mxu0 0.0
  %1163 = vmatpush1.msra.mxu0 0.0
  %1164 = vmatprep.subr.mxu0 0.0
  %1165 = vmatpush1.msra.mxu0 0.0
  %1166 = vmatprep.subr.mxu0 0.0
  %1167 = vmatpush1.msra.mxu0 0.0
  %1168 = vmatprep.subr.mxu0 0.0
  %1169 = vmatpush1.msra.mxu0 0.0
  %1170 = vmatprep.subr.mxu0 0.0
  %1171 = vmatpush1.msra.mxu0 0.0
  %1172 = vmatprep.subr.mxu0 0.0
  %1173 = vmatpush1.msra.mxu0 0.0
  %1174 = vmatprep.subr.mxu0 0.0
  %1175 = vmatpush1.msra.mxu0 0.0
  %1176 = vmatprep.subr.mxu0 0.0
  %1177 = vmatpush1.msra.mxu0 0.0
  %1178 = vmatprep.subr.mxu0 0.0
  %1179 = vmatpush1.msra.mxu0 0.0
  %1180 = vmatprep.subr.mxu0 0.0
  %1181 = vmatpush1.msra.mxu0 0.0
  %1182 = vmatprep.subr.mxu0 0.0
  %1183 = vmatpush1.msra.mxu0 0.0
  %1184 = vmatprep.subr.mxu0 0.0
  %1185 = vmatpush1.msra.mxu0 0.0
  %1186 = vmatprep.subr.mxu0 0.0
  %1187 = vmatpush1.msra.mxu0 0.0
  %1188 = vmatprep.subr.mxu0 0.0
  %1189 = vmatpush1.msra.mxu0 0.0
  %1190 = vmatprep.subr.mxu0 0.0
  %1191 = vmatpush1.msra.mxu0 0.0
  %1192 = vmatprep.subr.mxu0 0.0
  %1193 = vmatpush1.msra.mxu0 0.0
  %1194 = vmatprep.subr.mxu0 0.0
  %1195 = vmatpush1.msra.mxu0 0.0
  %1196 = vmatprep.subr.mxu0 0.0
  %1197 = vmatpush1.msra.mxu0 0.0
  %1198 = vmatprep.subr.mxu0 0.0
  %1199 = vmatpush1.msra.mxu0 0.0
  %1200 = vmatprep.subr.mxu0 0.0
  %1201 = vmatpush1.msra.mxu0 0.0
  %1202 = vmatprep.subr.mxu0 0.0
  %1203 = vmatpush1.msra.mxu0 0.0
  %1204 = vmatprep.subr.mxu0 0.0
  %1205 = vmatpush1.msra.mxu0 0.0
  %1206 = vmatprep.subr.mxu0 0.0
  %1207 = vmatpush1.msra.mxu0 0.0
  %1208 = vmatprep.subr.mxu0 0.0
  %1209 = vmatpush1.msra.mxu0 0.0
  %1210 = vmatprep.subr.mxu0 0.0
  %1211 = vmatpush1.msra.mxu0 0.0
  %1212 = vmatprep.subr.mxu0 0.0
  %1213 = vmatpush1.msra.mxu0 0.0
  %1214 = vmatprep.subr.mxu0 0.0
  %1215 = vmatpush1.msra.mxu0 0.0
  %1216 = vmatprep.subr.mxu0 0.0
  %1217 = vmatpush1.msra.mxu0 0.0
  %1218 = vmatprep.mubr.f32.mxu0 0.0
  %1219 = vmatmul.mubr.f32.gmra.mrb[0].mxu0 %v1143
  %v1220 = vpop.f32.mrb[0].mxu0
  %v1221 = vadd.f32 0.0, %v1220
  %v1222 = vpop.f32.mrb[0].mxu0
  %1223 = vmatprep.mubr.f32.mxu0 0.0
  %1224 = vmatmul.mubr.f32.gmra.mrb[0].mxu0 %v1146
  %v1225 = vpop.f32.mrb[0].mxu0
  %v1226 = vadd.f32 0.0, %v1225
  %v1227 = vpop.f32.mrb[0].mxu0
  %1228 = vmatprep.mubr.f32.mxu0 0.0
  %1229 = vmatmul.mubr.f32.gmra.mrb[0].mxu0 %v1149
  %v1230 = vpop.f32.mrb[0].mxu0
  %v1231 = vadd.f32 0.0, %v1230
  %v1232 = vpop.f32.mrb[0].mxu0
  %1233 = vmatprep.mubr.f32.mxu0 0.0
  %1234 = vmatmul.mubr.f32.gmra.mrb[0].mxu0 %v1152
  %v1235 = vpop.f32.mrb[0].mxu0
  %v1236 = vadd.f32 0.0, %v1235
  %v1237 = vpop.f32.mrb[0].mxu0
  %1238 = vdwg.mxu0
  %v1239 = vadd.f32 %v959, %v1221
  %v1240 = vadd.f32 %v964, %v1226
  %v1241 = vadd.f32 %v969, %v1231
  %v1242 = vadd.f32 %v974, %v1236
  %v1244 = vsel %vm879, %v1239, 0
  %v1247 = vsel %vm879, %v1240, 0
  %v1250 = vsel %vm879, %v1241, 0
  %v1253 = vsel %vm879, %v1242, 0
  %1255 = vmatprep.subr.mxu0 0.0
  %1256 = vmatpush1.msra.mxu0 %v868
  %1257 = vmatprep.subr.mxu0 0.0
  %1258 = vmatpush1.msra.mxu0 %v869
  %1259 = vmatprep.subr.mxu0 0.0
  %1260 = vmatpush1.msra.mxu0 %v870
  %1261 = vmatprep.subr.mxu0 0.0
  %1262 = vmatpush1.msra.mxu0 %v871
  %1263 = vmatprep.subr.mxu0 0.0
  %1264 = vmatpush1.msra.mxu0 0.0
  %1265 = vmatprep.subr.mxu0 0.0
  %1266 = vmatpush1.msra.mxu0 0.0
  %1267 = vmatprep.subr.mxu0 0.0
  %1268 = vmatpush1.msra.mxu0 0.0
  %1269 = vmatprep.subr.mxu0 0.0
  %1270 = vmatpush1.msra.mxu0 0.0
  %1271 = vmatprep.subr.mxu0 0.0
  %1272 = vmatpush1.msra.mxu0 0.0
  %1273 = vmatprep.subr.mxu0 0.0
  %1274 = vmatpush1.msra.mxu0 0.0
  %1275 = vmatprep.subr.mxu0 0.0
  %1276 = vmatpush1.msra.mxu0 0.0
  %1277 = vmatprep.subr.mxu0 0.0
  %1278 = vmatpush1.msra.mxu0 0.0
  %1279 = vmatprep.subr.mxu0 0.0
  %1280 = vmatpush1.msra.mxu0 0.0
  %1281 = vmatprep.subr.mxu0 0.0
  %1282 = vmatpush1.msra.mxu0 0.0
  %1283 = vmatprep.subr.mxu0 0.0
  %1284 = vmatpush1.msra.mxu0 0.0
  %1285 = vmatprep.subr.mxu0 0.0
  %1286 = vmatpush1.msra.mxu0 0.0
  %1287 = vmatprep.subr.mxu0 0.0
  %1288 = vmatpush1.msra.mxu0 0.0
  %1289 = vmatprep.subr.mxu0 0.0
  %1290 = vmatpush1.msra.mxu0 0.0
  %1291 = vmatprep.subr.mxu0 0.0
  %1292 = vmatpush1.msra.mxu0 0.0
  %1293 = vmatprep.subr.mxu0 0.0
  %1294 = vmatpush1.msra.mxu0 0.0
  %1295 = vmatprep.subr.mxu0 0.0
  %1296 = vmatpush1.msra.mxu0 0.0
  %1297 = vmatprep.subr.mxu0 0.0
  %1298 = vmatpush1.msra.mxu0 0.0
  %1299 = vmatprep.subr.mxu0 0.0
  %1300 = vmatpush1.msra.mxu0 0.0
  %1301 = vmatprep.subr.mxu0 0.0
  %1302 = vmatpush1.msra.mxu0 0.0
  %1303 = vmatprep.subr.mxu0 0.0
  %1304 = vmatpush1.msra.mxu0 0.0
  %1305 = vmatprep.subr.mxu0 0.0
  %1306 = vmatpush1.msra.mxu0 0.0
  %1307 = vmatprep.subr.mxu0 0.0
  %1308 = vmatpush1.msra.mxu0 0.0
  %1309 = vmatprep.subr.mxu0 0.0
  %1310 = vmatpush1.msra.mxu0 0.0
  %1311 = vmatprep.subr.mxu0 0.0
  %1312 = vmatpush1.msra.mxu0 0.0
  %1313 = vmatprep.subr.mxu0 0.0
  %1314 = vmatpush1.msra.mxu0 0.0
  %1315 = vmatprep.subr.mxu0 0.0
  %1316 = vmatpush1.msra.mxu0 0.0
  %1317 = vmatprep.subr.mxu0 0.0
  %1318 = vmatpush1.msra.mxu0 0.0
  %1319 = vmatprep.mubr.f32.mxu0 0.0
  %1320 = vmatmul.mubr.f32.gmra.mrb[0].mxu0 %v1244
  %v1321 = vpop.f32.mrb[0].mxu0
  %v1322 = vadd.f32 0.0, %v1321
  %v1323 = vpop.f32.mrb[0].mxu0
  %1324 = vmatprep.mubr.f32.mxu0 0.0
  %1325 = vmatmul.mubr.f32.gmra.mrb[0].mxu0 %v1247
  %v1326 = vpop.f32.mrb[0].mxu0
  %v1327 = vadd.f32 0.0, %v1326
  %v1328 = vpop.f32.mrb[0].mxu0
  %1329 = vmatprep.mubr.f32.mxu0 0.0
  %1330 = vmatmul.mubr.f32.gmra.mrb[0].mxu0 %v1250
  %v1331 = vpop.f32.mrb[0].mxu0
  %v1332 = vadd.f32 0.0, %v1331
  %v1333 = vpop.f32.mrb[0].mxu0
  %1334 = vmatprep.mubr.f32.mxu0 0.0
  %1335 = vmatmul.mubr.f32.gmra.mrb[0].mxu0 %v1253
  %v1336 = vpop.f32.mrb[0].mxu0
  %v1337 = vadd.f32 0.0, %v1336
  %v1338 = vpop.f32.mrb[0].mxu0
  %1339 = vdwg.mxu0
  %v1341 = vsel %vm879, %v1114, 0
  %v1344 = vsel %vm879, %v1115, 0
  %v1347 = vsel %vm879, %v1116, 0
  %v1350 = vsel %vm879, %v1117, 0
  %1352 = vmatprep.subr.mxu0 0.0
  %1353 = vmatpush1.msra.mxu0 %v864
  %1354 = vmatprep.subr.mxu0 0.0
  %1355 = vmatpush1.msra.mxu0 %v865
  %1356 = vmatprep.subr.mxu0 0.0
  %1357 = vmatpush1.msra.mxu0 %v866
  %1358 = vmatprep.subr.mxu0 0.0
  %1359 = vmatpush1.msra.mxu0 %v867
  %1360 = vmatprep.subr.mxu0 0.0
  %1361 = vmatpush1.msra.mxu0 0.0
  %1362 = vmatprep.subr.mxu0 0.0
  %1363 = vmatpush1.msra.mxu0 0.0
  %1364 = vmatprep.subr.mxu0 0.0
  %1365 = vmatpush1.msra.mxu0 0.0
  %1366 = vmatprep.subr.mxu0 0.0
  %1367 = vmatpush1.msra.mxu0 0.0
  %1368 = vmatprep.subr.mxu0 0.0
  %1369 = vmatpush1.msra.mxu0 0.0
  %1370 = vmatprep.subr.mxu0 0.0
  %1371 = vmatpush1.msra.mxu0 0.0
  %1372 = vmatprep.subr.mxu0 0.0
  %1373 = vmatpush1.msra.mxu0 0.0
  %1374 = vmatprep.subr.mxu0 0.0
  %1375 = vmatpush1.msra.mxu0 0.0
  %1376 = vmatprep.subr.mxu0 0.0
  %1377 = vmatpush1.msra.mxu0 0.0
  %1378 = vmatprep.subr.mxu0 0.0
  %1379 = vmatpush1.msra.mxu0 0.0
  %1380 = vmatprep.subr.mxu0 0.0
  %1381 = vmatpush1.msra.mxu0 0.0
  %1382 = vmatprep.subr.mxu0 0.0
  %1383 = vmatpush1.msra.mxu0 0.0
  %1384 = vmatprep.subr.mxu0 0.0
  %1385 = vmatpush1.msra.mxu0 0.0
  %1386 = vmatprep.subr.mxu0 0.0
  %1387 = vmatpush1.msra.mxu0 0.0
  %1388 = vmatprep.subr.mxu0 0.0
  %1389 = vmatpush1.msra.mxu0 0.0
  %1390 = vmatprep.subr.mxu0 0.0
  %1391 = vmatpush1.msra.mxu0 0.0
  %1392 = vmatprep.subr.mxu0 0.0
  %1393 = vmatpush1.msra.mxu0 0.0
  %1394 = vmatprep.subr.mxu0 0.0
  %1395 = vmatpush1.msra.mxu0 0.0
  %1396 = vmatprep.subr.mxu0 0.0
  %1397 = vmatpush1.msra.mxu0 0.0
  %1398 = vmatprep.subr.mxu0 0.0
  %1399 = vmatpush1.msra.mxu0 0.0
  %1400 = vmatprep.subr.mxu0 0.0
  %1401 = vmatpush1.msra.mxu0 0.0
  %1402 = vmatprep.subr.mxu0 0.0
  %1403 = vmatpush1.msra.mxu0 0.0
  %1404 = vmatprep.subr.mxu0 0.0
  %1405 = vmatpush1.msra.mxu0 0.0
  %1406 = vmatprep.subr.mxu0 0.0
  %1407 = vmatpush1.msra.mxu0 0.0
  %1408 = vmatprep.subr.mxu0 0.0
  %1409 = vmatpush1.msra.mxu0 0.0
  %1410 = vmatprep.subr.mxu0 0.0
  %1411 = vmatpush1.msra.mxu0 0.0
  %1412 = vmatprep.subr.mxu0 0.0
  %1413 = vmatpush1.msra.mxu0 0.0
  %1414 = vmatprep.subr.mxu0 0.0
  %1415 = vmatpush1.msra.mxu0 0.0
  %1416 = vmatprep.mubr.f32.mxu0 0.0
  %1417 = vmatmul.mubr.f32.gmra.mrb[0].mxu0 %v1341
  %v1418 = vpop.f32.mrb[0].mxu0
  %v1419 = vadd.f32 %v1322, %v1418
  %v1420 = vpop.f32.mrb[0].mxu0
  %1421 = vmatprep.mubr.f32.mxu0 0.0
  %1422 = vmatmul.mubr.f32.gmra.mrb[0].mxu0 %v1344
  %v1423 = vpop.f32.mrb[0].mxu0
  %v1424 = vadd.f32 %v1327, %v1423
  %v1425 = vpop.f32.mrb[0].mxu0
  %1426 = vmatprep.mubr.f32.mxu0 0.0
  %1427 = vmatmul.mubr.f32.gmra.mrb[0].mxu0 %v1347
  %v1428 = vpop.f32.mrb[0].mxu0
  %v1429 = vadd.f32 %v1332, %v1428
  %v1430 = vpop.f32.mrb[0].mxu0
  %1431 = vmatprep.mubr.f32.mxu0 0.0
  %1432 = vmatmul.mubr.f32.gmra.mrb[0].mxu0 %v1350
  %v1433 = vpop.f32.mrb[0].mxu0
  %v1434 = vadd.f32 %v1337, %v1433
  %v1435 = vpop.f32.mrb[0].mxu0
  %1436 = vdwg.mxu0
  %v1437 = vld [vmem:[%s17] sm:$0x1]
  %v1439 = vlaneseq
  %v1440 = vshrl.u32 %v1439, 7
  %v1441 = vsub.s32 0, %v1440
  %v1442 = vrot.slane %v1437, %v1441
  %v1444 = vadd.f32 %v1419, %v1442
  %v1445 = vadd.f32 %v1424, %v1442
  %v1446 = vadd.f32 %v1429, %v1442
  %v1447 = vadd.f32 %v1434, %v1442
  %v1448 = vld [vmem:[%s18] sm:$0xff]
  %v1449 = vld [vmem:[%s18 + $0x8] sm:$0xff]
  %v1450 = vld [vmem:[%s18 + $0x10] sm:$0xff]
  %v1451 = vld [vmem:[%s18 + $0x18] sm:$0xff]
  %v1452 = vld [vmem:[%s18 + $0x20] sm:$0xff]
  %v1453 = vld [vmem:[%s18 + $0x28] sm:$0xff]
  %v1454 = vld [vmem:[%s18 + $0x30] sm:$0xff]
  %v1455 = vld [vmem:[%s18 + $0x38] sm:$0xff]
  %v1457 = vsel %vm879, %v1444, 0
  %v1460 = vsel %vm879, %v1445, 0
  %v1463 = vsel %vm879, %v1446, 0
  %v1466 = vsel %vm879, %v1447, 0
  %1468 = vmatprep.subr.mxu0 0.0
  %1469 = vmatpush1.msra.mxu0 %v1452
  %1470 = vmatprep.subr.mxu0 0.0
  %1471 = vmatpush1.msra.mxu0 %v1453
  %1472 = vmatprep.subr.mxu0 0.0
  %1473 = vmatpush1.msra.mxu0 %v1454
  %1474 = vmatprep.subr.mxu0 0.0
  %1475 = vmatpush1.msra.mxu0 %v1455
  %1476 = vmatprep.subr.mxu0 0.0
  %1477 = vmatpush1.msra.mxu0 0.0
  %1478 = vmatprep.subr.mxu0 0.0
  %1479 = vmatpush1.msra.mxu0 0.0
  %1480 = vmatprep.subr.mxu0 0.0
  %1481 = vmatpush1.msra.mxu0 0.0
  %1482 = vmatprep.subr.mxu0 0.0
  %1483 = vmatpush1.msra.mxu0 0.0
  %1484 = vmatprep.subr.mxu0 0.0
  %1485 = vmatpush1.msra.mxu0 0.0
  %1486 = vmatprep.subr.mxu0 0.0
  %1487 = vmatpush1.msra.mxu0 0.0
  %1488 = vmatprep.subr.mxu0 0.0
  %1489 = vmatpush1.msra.mxu0 0.0
  %1490 = vmatprep.subr.mxu0 0.0
  %1491 = vmatpush1.msra.mxu0 0.0
  %1492 = vmatprep.subr.mxu0 0.0
  %1493 = vmatpush1.msra.mxu0 0.0
  %1494 = vmatprep.subr.mxu0 0.0
  %1495 = vmatpush1.msra.mxu0 0.0
  %1496 = vmatprep.subr.mxu0 0.0
  %1497 = vmatpush1.msra.mxu0 0.0
  %1498 = vmatprep.subr.mxu0 0.0
  %1499 = vmatpush1.msra.mxu0 0.0
  %1500 = vmatprep.subr.mxu0 0.0
  %1501 = vmatpush1.msra.mxu0 0.0
  %1502 = vmatprep.subr.mxu0 0.0
  %1503 = vmatpush1.msra.mxu0 0.0
  %1504 = vmatprep.subr.mxu0 0.0
  %1505 = vmatpush1.msra.mxu0 0.0
  %1506 = vmatprep.subr.mxu0 0.0
  %1507 = vmatpush1.msra.mxu0 0.0
  %1508 = vmatprep.subr.mxu0 0.0
  %1509 = vmatpush1.msra.mxu0 0.0
  %1510 = vmatprep.subr.mxu0 0.0
  %1511 = vmatpush1.msra.mxu0 0.0
  %1512 = vmatprep.subr.mxu0 0.0
  %1513 = vmatpush1.msra.mxu0 0.0
  %1514 = vmatprep.subr.mxu0 0.0
  %1515 = vmatpush1.msra.mxu0 0.0
  %1516 = vmatprep.subr.mxu0 0.0
  %1517 = vmatpush1.msra.mxu0 0.0
  %1518 = vmatprep.subr.mxu0 0.0
  %1519 = vmatpush1.msra.mxu0 0.0
  %1520 = vmatprep.subr.mxu0 0.0
  %1521 = vmatpush1.msra.mxu0 0.0
  %1522 = vmatprep.subr.mxu0 0.0
  %1523 = vmatpush1.msra.mxu0 0.0
  %1524 = vmatprep.subr.mxu0 0.0
  %1525 = vmatpush1.msra.mxu0 0.0
  %1526 = vmatprep.subr.mxu0 0.0
  %1527 = vmatpush1.msra.mxu0 0.0
  %1528 = vmatprep.subr.mxu0 0.0
  %1529 = vmatpush1.msra.mxu0 0.0
  %1530 = vmatprep.subr.mxu0 0.0
  %1531 = vmatpush1.msra.mxu0 0.0
  %1532 = vmatprep.mubr.f32.mxu0 0.0
  %1533 = vmatmul.mubr.f32.gmra.mrb[0].mxu0 %v1457
  %v1534 = vpop.f32.mrb[0].mxu0
  %v1535 = vadd.f32 0.0, %v1534
  %v1536 = vpop.f32.mrb[0].mxu0
  %1537 = vmatprep.mubr.f32.mxu0 0.0
  %1538 = vmatmul.mubr.f32.gmra.mrb[0].mxu0 %v1460
  %v1539 = vpop.f32.mrb[0].mxu0
  %v1540 = vadd.f32 0.0, %v1539
  %v1541 = vpop.f32.mrb[0].mxu0
  %1542 = vmatprep.mubr.f32.mxu0 0.0
  %1543 = vmatmul.mubr.f32.gmra.mrb[0].mxu0 %v1463
  %v1544 = vpop.f32.mrb[0].mxu0
  %v1545 = vadd.f32 0.0, %v1544
  %v1546 = vpop.f32.mrb[0].mxu0
  %1547 = vmatprep.mubr.f32.mxu0 0.0
  %1548 = vmatmul.mubr.f32.gmra.mrb[0].mxu0 %v1466
  %v1549 = vpop.f32.mrb[0].mxu0
  %v1550 = vadd.f32 0.0, %v1549
  %v1551 = vpop.f32.mrb[0].mxu0
  %1552 = vdwg.mxu0
  %1553 = vmatprep.subr.mxu0 0.0
  %1554 = vmatpush1.msra.mxu0 %v1448
  %1555 = vmatprep.subr.mxu0 0.0
  %1556 = vmatpush1.msra.mxu0 %v1449
  %1557 = vmatprep.subr.mxu0 0.0
  %1558 = vmatpush1.msra.mxu0 %v1450
  %1559 = vmatprep.subr.mxu0 0.0
  %1560 = vmatpush1.msra.mxu0 %v1451
  %1561 = vmatprep.subr.mxu0 0.0
  %1562 = vmatpush1.msra.mxu0 0.0
  %1563 = vmatprep.subr.mxu0 0.0
  %1564 = vmatpush1.msra.mxu0 0.0
  %1565 = vmatprep.subr.mxu0 0.0
  %1566 = vmatpush1.msra.mxu0 0.0
  %1567 = vmatprep.subr.mxu0 0.0
  %1568 = vmatpush1.msra.mxu0 0.0
  %1569 = vmatprep.subr.mxu0 0.0
  %1570 = vmatpush1.msra.mxu0 0.0
  %1571 = vmatprep.subr.mxu0 0.0
  %1572 = vmatpush1.msra.mxu0 0.0
  %1573 = vmatprep.subr.mxu0 0.0
  %1574 = vmatpush1.msra.mxu0 0.0
  %1575 = vmatprep.subr.mxu0 0.0
  %1576 = vmatpush1.msra.mxu0 0.0
  %1577 = vmatprep.subr.mxu0 0.0
  %1578 = vmatpush1.msra.mxu0 0.0
  %1579 = vmatprep.subr.mxu0 0.0
  %1580 = vmatpush1.msra.mxu0 0.0
  %1581 = vmatprep.subr.mxu0 0.0
  %1582 = vmatpush1.msra.mxu0 0.0
  %1583 = vmatprep.subr.mxu0 0.0
  %1584 = vmatpush1.msra.mxu0 0.0
  %1585 = vmatprep.subr.mxu0 0.0
  %1586 = vmatpush1.msra.mxu0 0.0
  %1587 = vmatprep.subr.mxu0 0.0
  %1588 = vmatpush1.msra.mxu0 0.0
  %1589 = vmatprep.subr.mxu0 0.0
  %1590 = vmatpush1.msra.mxu0 0.0
  %1591 = vmatprep.subr.mxu0 0.0
  %1592 = vmatpush1.msra.mxu0 0.0
  %1593 = vmatprep.subr.mxu0 0.0
  %1594 = vmatpush1.msra.mxu0 0.0
  %1595 = vmatprep.subr.mxu0 0.0
  %1596 = vmatpush1.msra.mxu0 0.0
  %1597 = vmatprep.subr.mxu0 0.0
  %1598 = vmatpush1.msra.mxu0 0.0
  %1599 = vmatprep.subr.mxu0 0.0
  %1600 = vmatpush1.msra.mxu0 0.0
  %1601 = vmatprep.subr.mxu0 0.0
  %1602 = vmatpush1.msra.mxu0 0.0
  %1603 = vmatprep.subr.mxu0 0.0
  %1604 = vmatpush1.msra.mxu0 0.0
  %1605 = vmatprep.subr.mxu0 0.0
  %1606 = vmatpush1.msra.mxu0 0.0
  %1607 = vmatprep.subr.mxu0 0.0
  %1608 = vmatpush1.msra.mxu0 0.0
  %1609 = vmatprep.subr.mxu0 0.0
  %1610 = vmatpush1.msra.mxu0 0.0
  %1611 = vmatprep.subr.mxu0 0.0
  %1612 = vmatpush1.msra.mxu0 0.0
  %1613 = vmatprep.subr.mxu0 0.0
  %1614 = vmatpush1.msra.mxu0 0.0
  %1615 = vmatprep.subr.mxu0 0.0
  %1616 = vmatpush1.msra.mxu0 0.0
  %1617 = vmatprep.mubr.f32.mxu0 0.0
  %1618 = vmatmul.mubr.f32.gmra.mrb[0].mxu0 %v881
  %v1619 = vpop.f32.mrb[0].mxu0
  %v1620 = vadd.f32 %v1535, %v1619
  %v1621 = vpop.f32.mrb[0].mxu0
  %1622 = vmatprep.mubr.f32.mxu0 0.0
  %1623 = vmatmul.mubr.f32.gmra.mrb[0].mxu0 %v884
  %v1624 = vpop.f32.mrb[0].mxu0
  %v1625 = vadd.f32 %v1540, %v1624
  %v1626 = vpop.f32.mrb[0].mxu0
  %1627 = vmatprep.mubr.f32.mxu0 0.0
  %1628 = vmatmul.mubr.f32.gmra.mrb[0].mxu0 %v887
  %v1629 = vpop.f32.mrb[0].mxu0
  %v1630 = vadd.f32 %v1545, %v1629
  %v1631 = vpop.f32.mrb[0].mxu0
  %1632 = vmatprep.mubr.f32.mxu0 0.0
  %1633 = vmatmul.mubr.f32.gmra.mrb[0].mxu0 %v890
  %v1634 = vpop.f32.mrb[0].mxu0
  %v1635 = vadd.f32 %v1550, %v1634
  %v1636 = vpop.f32.mrb[0].mxu0
  %1637 = vdwg.mxu0
  %v1638 = vld [vmem:[%s19] sm:$0x1]
  %v1640 = vlaneseq
  %v1641 = vshrl.u32 %v1640, 7
  %v1642 = vsub.s32 0, %v1641
  %v1643 = vrot.slane %v1638, %v1642
  %v1645 = vadd.f32 %v1620, %v1643
  %v1646 = vadd.f32 %v1625, %v1643
  %v1647 = vadd.f32 %v1630, %v1643
  %v1648 = vadd.f32 %v1635, %v1643
  %v1649 = vmax.f32 %v1645, 0.0
  %v1650 = vmax.f32 %v1646, 0.0
  %v1651 = vmax.f32 %v1647, 0.0
  %v1652 = vmax.f32 %v1648, 0.0
  %v1653 = vld [vmem:[%s20] sm:$0xff]
  %v1654 = vld [vmem:[%s20 + $0x8] sm:$0xff]
  %v1655 = vld [vmem:[%s20 + $0x10] sm:$0xff]
  %v1656 = vld [vmem:[%s20 + $0x18] sm:$0xff]
  %v1657 = vld [vmem:[%s20 + $0x20] sm:$0xff]
  %v1658 = vld [vmem:[%s20 + $0x28] sm:$0xff]
  %v1659 = vld [vmem:[%s20 + $0x30] sm:$0xff]
  %v1660 = vld [vmem:[%s20 + $0x38] sm:$0xff]
  %v1661 = vld [vmem:[%s21] sm:$0x1]
  %v1663 = vlaneseq
  %v1664 = vshrl.u32 %v1663, 7
  %v1665 = vsub.s32 0, %v1664
  %v1666 = vrot.slane %v1661, %v1665
  %vm1668 = vcmask 523264
  %v1670 = vsel %vm1668, %v1649, 0
  %v1673 = vsel %vm1668, %v1650, 0
  %v1676 = vsel %vm1668, %v1651, 0
  %v1679 = vsel %vm1668, %v1652, 0
  %1681 = vmatprep.subr.mxu0 0.0
  %1682 = vmatpush1.msra.mxu0 %v1653
  %1683 = vmatprep.subr.mxu0 0.0
  %1684 = vmatpush1.msra.mxu0 %v1654
  %1685 = vmatprep.subr.mxu0 0.0
  %1686 = vmatpush1.msra.mxu0 %v1655
  %1687 = vmatprep.subr.mxu0 0.0
  %1688 = vmatpush1.msra.mxu0 %v1656
  %1689 = vmatprep.subr.mxu0 0.0
  %1690 = vmatpush1.msra.mxu0 %v1657
  %1691 = vmatprep.subr.mxu0 0.0
  %1692 = vmatpush1.msra.mxu0 %v1658
  %1693 = vmatprep.subr.mxu0 0.0
  %1694 = vmatpush1.msra.mxu0 %v1659
  %1695 = vmatprep.subr.mxu0 0.0
  %1696 = vmatpush1.msra.mxu0 %v1660
  %1697 = vmatprep.subr.mxu0 0.0
  %1698 = vmatpush1.msra.mxu0 0.0
  %1699 = vmatprep.subr.mxu0 0.0
  %1700 = vmatpush1.msra.mxu0 0.0
  %1701 = vmatprep.subr.mxu0 0.0
  %1702 = vmatpush1.msra.mxu0 0.0
  %1703 = vmatprep.subr.mxu0 0.0
  %1704 = vmatpush1.msra.mxu0 0.0
  %1705 = vmatprep.subr.mxu0 0.0
  %1706 = vmatpush1.msra.mxu0 0.0
  %1707 = vmatprep.subr.mxu0 0.0
  %1708 = vmatpush1.msra.mxu0 0.0
  %1709 = vmatprep.subr.mxu0 0.0
  %1710 = vmatpush1.msra.mxu0 0.0
  %1711 = vmatprep.subr.mxu0 0.0
  %1712 = vmatpush1.msra.mxu0 0.0
  %1713 = vmatprep.subr.mxu0 0.0
  %1714 = vmatpush1.msra.mxu0 0.0
  %1715 = vmatprep.subr.mxu0 0.0
  %1716 = vmatpush1.msra.mxu0 0.0
  %1717 = vmatprep.subr.mxu0 0.0
  %1718 = vmatpush1.msra.mxu0 0.0
  %1719 = vmatprep.subr.mxu0 0.0
  %1720 = vmatpush1.msra.mxu0 0.0
  %1721 = vmatprep.subr.mxu0 0.0
  %1722 = vmatpush1.msra.mxu0 0.0
  %1723 = vmatprep.subr.mxu0 0.0
  %1724 = vmatpush1.msra.mxu0 0.0
  %1725 = vmatprep.subr.mxu0 0.0
  %1726 = vmatpush1.msra.mxu0 0.0
  %1727 = vmatprep.subr.mxu0 0.0
  %1728 = vmatpush1.msra.mxu0 0.0
  %1729 = vmatprep.subr.mxu0 0.0
  %1730 = vmatpush1.msra.mxu0 0.0
  %1731 = vmatprep.subr.mxu0 0.0
  %1732 = vmatpush1.msra.mxu0 0.0
  %1733 = vmatprep.subr.mxu0 0.0
  %1734 = vmatpush1.msra.mxu0 0.0
  %1735 = vmatprep.subr.mxu0 0.0
  %1736 = vmatpush1.msra.mxu0 0.0
  %1737 = vmatprep.subr.mxu0 0.0
  %1738 = vmatpush1.msra.mxu0 0.0
  %1739 = vmatprep.subr.mxu0 0.0
  %1740 = vmatpush1.msra.mxu0 0.0
  %1741 = vmatprep.subr.mxu0 0.0
  %1742 = vmatpush1.msra.mxu0 0.0
  %1743 = vmatprep.subr.mxu0 0.0
  %1744 = vmatpush1.msra.mxu0 0.0
  %1745 = vmatprep.mubr.f32.mxu0 0.0
  %1746 = vmatmul.mubr.f32.gmra.mrb[0].mxu0 %v1670
  %v1747 = vpop.f32.mrb[0].mxu0
  %v1748 = vadd.f32 %v1666, %v1747
  %v1749 = vpop.f32.mrb[0].mxu0
  %1750 = vmatprep.mubr.f32.mxu0 0.0
  %1751 = vmatmul.mubr.f32.gmra.mrb[0].mxu0 %v1673
  %v1752 = vpop.f32.mrb[0].mxu0
  %v1753 = vadd.f32 %v1666, %v1752
  %v1754 = vpop.f32.mrb[0].mxu0
  %1755 = vmatprep.mubr.f32.mxu0 0.0
  %1756 = vmatmul.mubr.f32.gmra.mrb[0].mxu0 %v1676
  %v1757 = vpop.f32.mrb[0].mxu0
  %v1758 = vadd.f32 %v1666, %v1757
  %v1759 = vpop.f32.mrb[0].mxu0
  %1760 = vmatprep.mubr.f32.mxu0 0.0
  %1761 = vmatmul.mubr.f32.gmra.mrb[0].mxu0 %v1679
  %v1762 = vpop.f32.mrb[0].mxu0
  %v1763 = vadd.f32 %v1666, %v1762
  %v1764 = vpop.f32.mrb[0].mxu0
  %1765 = vdwg.mxu0
  %1766 = vst [vmem:[%s22] sm:$0xff] %v1748
  %1767 = vst [vmem:[%s22 + $0x8] sm:$0xff] %v1753
  %1768 = vst [vmem:[%s22 + $0x10] sm:$0xff] %v1758
  %1769 = vst [vmem:[%s22 + $0x18] sm:$0xff] %v1763
  // Predicated region
  $region90: #{autostf_forward.1} parent=0 // pred_check
    _
  $region91: #{autostf_forward.1} parent=0 // pred_check_branch
    %1771 = sbr.rel (0) target = $region93
  $region92: #{autostf_forward.1} parent=0 // pred_region
    _
  $region93: #{autostf_forward.1} parent=0 // pred_fallthru
    _
  // Predicated region
  $region94: #{autostf_forward.1} parent=0 // pred_check
    _
  $region95: #{autostf_forward.1} parent=0 // pred_check_branch
    %1773 = sbr.rel (0) target = $region97
  $region96: #{autostf_forward.1} parent=0 // pred_region
    _
  $region97: #{autostf_forward.1} parent=0 // pred_fallthru
    _

</llo_original>
